<compile_context>
chip_gen: v7x
topology: tpu7x:2x2x1
jax: 0.10.0
libtpu: 0.0.40
codegen_flags: <defaults>
</compile_context>

<pallas_src>
import functools

import jax
import jax.numpy as jnp
from jax import lax
from jax.experimental import pallas as pl
from jax.experimental.pallas import tpu as pltpu


# ----------------------------- in-kernel math --------------------------------
def _mish(x):
    # x * tanh(softplus(x)) with a single transcendental:
    # tanh(log1p(e)) == n / (n + 2), n = e * (e + 2), e = exp(x)
    e = jnp.exp(jnp.minimum(x, 20.0))
    n = e * (e + 2.0)
    t = n * pl.reciprocal(n + 2.0, approx=True)
    # torch softplus threshold=20 passthrough (mish(x) == x for x > 20 in f32)
    return x * jnp.where(x > 20.0, 1.0, t)


# ----------------------------- Pallas kernel ----------------------------------
def _bottleneck_kernel(x_ref, w1_ref, b1_ref, w2_ref, b2_ref, w3_ref, b3_ref,
                       *rest, H, W, downsample, apply_in, apply_mish):
    if downsample:
        wd_ref, bd_ref, o_ref, pad_ref = rest
    else:
        o_ref, pad_ref = rest

    HW = H * W
    P = W + 1                      # zero border (one row + one pixel) on each side
    C1 = w1_ref.shape[0]

    def dot(a, b):
        return jnp.dot(a, b, preferred_element_type=jnp.float32)

    x = x_ref[...]                                         # (Cin, HW) compute dtype

    # ---- residual path: 1x1 downsample conv + folded BN, or identity ----
    if downsample:
        res = dot(wd_ref[...], x) + bd_ref[...]            # (Cexp, HW) f32
    else:
        res = x.astype(jnp.float32)

    # ---- conv1 (1x1) + bn1 + mish ----
    h1 = _mish(dot(w1_ref[...], x) + b1_ref[...])          # (C1, HW) f32

    # ---- conv2 (3x3, pad 1, stride 1) + bn2 + mish ----
    # 9 accumulated matmuls over statically shifted slices of a zero-padded
    # flat copy of h1 kept in VMEM scratch (in-VMEM im2col).
    pad_ref[...] = jnp.zeros(pad_ref.shape, pad_ref.dtype)
    pad_ref[:, P:P + HW] = h1.astype(pad_ref.dtype)

    col = lax.broadcasted_iota(jnp.int32, (1, HW), 1) % W
    mask_l = (col >= 1).astype(pad_ref.dtype)              # valid when dx == -1
    mask_r = (col <= W - 2).astype(pad_ref.dtype)          # valid when dx == +1

    acc = jnp.zeros((C1, HW), jnp.float32)
    tap_idx = 0
    for dy in (-1, 0, 1):
        for dx in (-1, 0, 1):
            start = P + dy * W + dx                        # static slice start
            tap = pad_ref[:, start:start + HW]             # (C1, HW)
            if dx == -1:
                tap = tap * mask_l
            elif dx == 1:
                tap = tap * mask_r
            acc = acc + dot(w2_ref[tap_idx], tap)          # (C1out, C1in) @ (C1in, HW)
            tap_idx += 1
    h2 = _mish(acc + b2_ref[...])                          # (C1, HW) f32

    # ---- conv3 (1x1) + bn3 + residual ----
    y = dot(w3_ref[...], h2.astype(x.dtype)) + b3_ref[...]  # (Cexp, HW) f32
    y = y + res

    # ---- InstanceNorm2d(affine=False): per-image, per-channel over H*W ----
    if apply_in:
        mean = jnp.mean(y, axis=1, keepdims=True)
        var = jnp.mean(jnp.square(y - mean), axis=1, keepdims=True)
        y = (y - mean) * lax.rsqrt(var + 1e-5)
    if apply_mish:
        y = _mish(y)

    o_ref[...] = y.astype(o_ref.dtype)


# ----------------------------- wrapper ----------------------------------------
def bottleneck_forward(x_list, params, cfg, *, use_bf16_matmul=False):
    """Forward pass of the PyTorch Bottleneck block (BN in eval mode)."""
    x_nchw, w_arr, robust = x_list
    assert cfg["stride"] == 1, "TODO(synk): only stride=1 is implemented"

    N, Cin, H, W = x_nchw.shape
    HW = H * W
    cdt = jnp.bfloat16 if use_bf16_matmul else jnp.float32
    eps = 1e-5

    C1 = params["conv1"].shape[0]
    Cexp = params["conv3"].shape[0]

    def fold(bn):
        g, b, m, v = bn
        s = g / jnp.sqrt(v + eps)
        return s, b - m * s

    s1, b1 = fold(params["bn1"])
    s2, b2 = fold(params["bn2"])
    s3, b3 = fold(params["bn3"])

    # BN scale folded into transposed ((Cout, K)-shaped) conv weights.
    w1 = (params["conv1"][:, :, 0, 0] * s1[:, None]).astype(cdt)            # (C1, Cin)
    w2 = (jnp.transpose(params["conv2"], (2, 3, 0, 1)).reshape(9, C1, C1)
          * s2[None, :, None]).astype(cdt)                                  # (9, C1out, C1in)
    w3 = (params["conv3"][:, :, 0, 0] * s3[:, None]).astype(cdt)            # (Cexp, C1)

    # Flattened NCHW: lane axis = H*W (metadata-only reshape, no transpose).
    x2 = x_nchw.reshape(N, Cin, HW).astype(cdt)

    downsample = cfg["downsample"]
    apply_in = bool(robust) and cfg["use_in"]
    apply_mish = cfg["use_relu"]

    in_specs = [
        pl.BlockSpec((None, Cin, HW), lambda n: (n, 0, 0)),   # x (one image/step)
        pl.BlockSpec((C1, Cin), lambda n: (0, 0)),            # w1
        pl.BlockSpec((C1, 1), lambda n: (0, 0)),              # b1
        pl.BlockSpec((9, C1, C1), lambda n: (0, 0, 0)),       # w2 taps
        pl.BlockSpec((C1, 1), lambda n: (0, 0)),              # b2
        pl.BlockSpec((Cexp, C1), lambda n: (0, 0)),           # w3
        pl.BlockSpec((Cexp, 1), lambda n: (0, 0)),            # b3
    ]
    operands = [x2, w1, b1.reshape(C1, 1), w2, b2.reshape(C1, 1),
                w3, b3.reshape(Cexp, 1)]

    if downsample:
        sd, bd = fold(params["bn_d"])
        wd = (params["conv_d"][:, :, 0, 0] * sd[:, None]).astype(cdt)       # (Cexp, Cin)
        in_specs += [pl.BlockSpec((Cexp, Cin), lambda n: (0, 0)),
                     pl.BlockSpec((Cexp, 1), lambda n: (0, 0))]
        operands += [wd, bd.reshape(Cexp, 1)]
    else:
        # identity residual: out += x needs matching channel counts
        assert Cin == Cexp, "identity residual needs in_channels == channels*expansion"

    kernel = functools.partial(
        _bottleneck_kernel, H=H, W=W, downsample=downsample,
        apply_in=apply_in, apply_mish=apply_mish)

    # Per-step VMEM: ~2*(Cin+Cexp)*HW*4B double-buffered blocks + tiny weights +
    # (C1, HW+2W+2) scratch -- far below the 32 MiB scoped default at these sizes.
    out = pl.pallas_call(
        kernel,
        out_shape=jax.ShapeDtypeStruct((N, Cexp, HW), jnp.float32),
        grid=(N,),
        in_specs=in_specs,
        out_specs=pl.BlockSpec((None, Cexp, HW), lambda n: (n, 0, 0)),
        scratch_shapes=[pltpu.VMEM((C1, HW + 2 * (W + 1)), cdt)],
        compiler_params=pltpu.CompilerParams(
            dimension_semantics=("parallel",)),
    )(*operands)

    out = out.reshape(N, Cexp, H, W)               # still NCHW: metadata-only

    w_arr = list(w_arr)
    if apply_in:
        # nn.Mish(inplace=True) => the appended tensor aliases the final output.
        w_arr.append(out)
    return [out, w_arr, robust]


# ----------------------------- pure-JAX reference ------------------------------
def _ref_forward(x_list, params, cfg):
    x, w_arr, robust = x_list
    eps = 1e-5
    prec = lax.Precision.HIGHEST

    def conv(inp, w, stride, pad):
        return lax.conv_general_dilated(
            inp, w, (stride, stride), [(pad, pad), (pad, pad)],
            dimension_numbers=("NCHW", "OIHW", "NCHW"), precision=prec)

    def bn(inp, prm):
        g, b, m, v = prm
        s = (g / jnp.sqrt(v + eps))[None, :, None, None]
        return (inp - m[None, :, None, None]) * s + b[None, :, None, None]

    def mish(t):
        sp = jnp.where(t > 20.0, t, jnp.log1p(jnp.exp(jnp.minimum(t, 20.0))))
        return t * jnp.tanh(sp)

    s = cfg["stride"]
    if cfg["downsample"]:
        residual = bn(conv(x, params["conv_d"], s, 0), params["bn_d"])
    else:
        residual = x
    out = mish(bn(conv(x, params["conv1"], 1, 0), params["bn1"]))
    out = mish(bn(conv(out, params["conv2"], s, 1), params["bn2"]))
    out = bn(conv(out, params["conv3"], 1, 0), params["bn3"])
    out = out + residual
    w_arr = list(w_arr)
    if robust and cfg["use_in"]:
        mean = jnp.mean(out, axis=(2, 3), keepdims=True)
        var = jnp.mean(jnp.square(out - mean), axis=(2, 3), keepdims=True)
        out = (out - mean) / jnp.sqrt(var + eps)
    if cfg["use_relu"]:
        out = mish(out)
    if robust and cfg["use_in"]:
        w_arr.append(out)          # inplace-Mish aliasing in the original module
    return [out, w_arr, robust]


# ----------------------------------- main --------------------------------------
if __name__ == "__main__":
    root = jax.random.PRNGKey(0)

    def make_bn(k, c):
        k0, k1, k2, k3 = jax.random.split(k, 4)
        return (1.0 + 0.1 * jax.random.normal(k0, (c,), jnp.float32),   # gamma
                0.05 * jax.random.normal(k1, (c,), jnp.float32),        # beta
                0.1 * jax.random.normal(k2, (c,), jnp.float32),         # running_mean
                0.5 + jax.random.uniform(k3, (c,), jnp.float32))        # running_var

    # -------- config A: downsample branch, robust & IN on ----------------------
    N, Cin, H, W = 2, 4, 16, 16
    channels, expansion = 4, 2
    C1, Cexp = channels, channels * expansion
    cfgA = dict(stride=1, downsample=True, use_relu=True, use_in=True)
    ka = jax.random.split(jax.random.fold_in(root, 0), 9)
    paramsA = {
        "conv1": 0.2 * jax.random.normal(ka[0], (C1, Cin, 1, 1), jnp.float32),
        "bn1": make_bn(ka[1], C1),
        "conv2": 0.2 * jax.random.normal(ka[2], (C1, C1, 3, 3), jnp.float32),
        "bn2": make_bn(ka[3], C1),
        "conv3": 0.2 * jax.random.normal(ka[4], (Cexp, C1, 1, 1), jnp.float32),
        "bn3": make_bn(ka[5], Cexp),
        "conv_d": 0.2 * jax.random.normal(ka[6], (Cexp, Cin, 1, 1), jnp.float32),
        "bn_d": make_bn(ka[7], Cexp),
    }
    xA = jax.random.normal(ka[8], (N, Cin, H, W), jnp.float32)

    refA = _ref_forward([xA, [], True], paramsA, cfgA)

    outA = bottleneck_forward([xA, [], True], paramsA, cfgA)
    oA = jax.block_until_ready(outA[0])
    assert oA.shape == (N, Cexp, H, W)
    # tolerance covers the approx-reciprocal Mish + MXU accumulation order
    assert jnp.allclose(oA, refA[0], atol=1e-2, rtol=1e-2), \
        f"config A (f32) max abs err = {float(jnp.max(jnp.abs(oA - refA[0])))}"
    assert len(outA[1]) == 1 and outA[2] is True

    # same config with bf16 MXU operands (v6e/v7x fast path), f32 epilogue
    outA16 = bottleneck_forward([xA, [], True], paramsA, cfgA,
                                use_bf16_matmul=True)
    oA16 = jax.block_until_ready(outA16[0])
    errA16 = float(jnp.max(jnp.abs(oA16 - refA[0])))
    assert errA16 < 0.25, f"config A (bf16) max abs err = {errA16}"

    # -------- config B: identity residual, robust off --------------------------
    CinB = channels * expansion          # identity residual needs Cin == C*expansion
    cfgB = dict(stride=1, downsample=False, use_relu=True, use_in=True)
    kb = jax.random.split(jax.random.fold_in(root, 1), 7)
    paramsB = {
        "conv1": 0.2 * jax.random.normal(kb[0], (C1, CinB, 1, 1), jnp.float32),
        "bn1": make_bn(kb[1], C1),
        "conv2": 0.2 * jax.random.normal(kb[2], (C1, C1, 3, 3), jnp.float32),
        "bn2": make_bn(kb[3], C1),
        "conv3": 0.2 * jax.random.normal(kb[4], (Cexp, C1, 1, 1), jnp.float32),
        "bn3": make_bn(kb[5], Cexp),
    }
    xB = jax.random.normal(kb[6], (N, CinB, H, W), jnp.float32)

    refB = _ref_forward([xB, [], False], paramsB, cfgB)
    outB = bottleneck_forward([xB, [], False], paramsB, cfgB)
    oB = jax.block_until_ready(outB[0])
    assert jnp.allclose(oB, refB[0], atol=1e-2, rtol=1e-2), \
        f"config B (f32) max abs err = {float(jnp.max(jnp.abs(oB - refB[0])))}"
    assert len(outB[1]) == 0

    print("KERNEL_OK")
</pallas_src>

<mosaic_0001>
module attributes {stable_mosaic.version = 11 : i64} {
  func.func @_bottleneck_kernel(%arg0: i32, %arg1: memref<1x4x256xf32, #tpu.memory_space<vmem>>, %arg2: memref<4x4xf32, #tpu.memory_space<vmem>>, %arg3: memref<4x1xf32, #tpu.memory_space<vmem>>, %arg4: memref<9x4x4xf32, #tpu.memory_space<vmem>>, %arg5: memref<4x1xf32, #tpu.memory_space<vmem>>, %arg6: memref<8x4xf32, #tpu.memory_space<vmem>>, %arg7: memref<8x1xf32, #tpu.memory_space<vmem>>, %arg8: memref<8x4xf32, #tpu.memory_space<vmem>>, %arg9: memref<8x1xf32, #tpu.memory_space<vmem>>, %arg10: memref<1x8x256xf32, #tpu.memory_space<vmem>>, %arg11: memref<4x290xf32, #tpu.memory_space<vmem>>) attributes {dimension_semantics = [#tpu.dimension_semantics<parallel>], iteration_bounds = array<i64: 2>, scalar_prefetch = 0 : i64, scratch_operands = 1 : i64, tpu.core_type = #tpu.core_type<tc>, window_params = [{transform_indices = @transform_0, window_bounds = array<i64: 1, 4, 256>}, {pipeline_mode = #tpu.pipeline_mode<synchronous>, transform_indices = @transform_1, window_bounds = array<i64: 4, 4>}, {pipeline_mode = #tpu.pipeline_mode<synchronous>, transform_indices = @transform_2, window_bounds = array<i64: 4, 1>}, {pipeline_mode = #tpu.pipeline_mode<synchronous>, transform_indices = @transform_3, window_bounds = array<i64: 9, 4, 4>}, {pipeline_mode = #tpu.pipeline_mode<synchronous>, transform_indices = @transform_4, window_bounds = array<i64: 4, 1>}, {pipeline_mode = #tpu.pipeline_mode<synchronous>, transform_indices = @transform_5, window_bounds = array<i64: 8, 4>}, {pipeline_mode = #tpu.pipeline_mode<synchronous>, transform_indices = @transform_6, window_bounds = array<i64: 8, 1>}, {pipeline_mode = #tpu.pipeline_mode<synchronous>, transform_indices = @transform_7, window_bounds = array<i64: 8, 4>}, {pipeline_mode = #tpu.pipeline_mode<synchronous>, transform_indices = @transform_8, window_bounds = array<i64: 8, 1>}, {transform_indices = @transform_9, window_bounds = array<i64: 1, 8, 256>}]} {
    %c0 = arith.constant 0 : index
    %c0_0 = arith.constant 0 : index
    %c0_1 = arith.constant 0 : index
    %0 = vector.load %arg1[%c0, %c0_0, %c0_1] : memref<1x4x256xf32, #tpu.memory_space<vmem>>, vector<1x4x256xf32>
    %1 = vector.shape_cast %0 : vector<1x4x256xf32> to vector<4x256xf32>
    %c0_2 = arith.constant 0 : index
    %c0_3 = arith.constant 0 : index
    %2 = vector.load %arg8[%c0_2, %c0_3] : memref<8x4xf32, #tpu.memory_space<vmem>>, vector<8x4xf32>
    %cst = arith.constant dense<0.000000e+00> : vector<8x256xf32>
    %3 = tpu.matmul %2, %1, %cst {dimension_numbers = #tpu.dot_dimension_numbers<[1], [0], [0], [1], [0, 0, 1, 1], [], []>} : vector<8x4xf32>, vector<4x256xf32>, vector<8x256xf32> -> vector<8x256xf32>
    %c0_4 = arith.constant 0 : index
    %c0_5 = arith.constant 0 : index
    %4 = vector.load %arg9[%c0_4, %c0_5] : memref<8x1xf32, #tpu.memory_space<vmem>>, vector<8x1xf32>
    %5 = vector.broadcast %4 : vector<8x1xf32> to vector<8x256xf32>
    %6 = arith.addf %3, %5 : vector<8x256xf32>
    %c0_6 = arith.constant 0 : index
    %c0_7 = arith.constant 0 : index
    %7 = vector.load %arg2[%c0_6, %c0_7] : memref<4x4xf32, #tpu.memory_space<vmem>>, vector<4x4xf32>
    %cst_8 = arith.constant dense<0.000000e+00> : vector<4x256xf32>
    %8 = tpu.matmul %7, %1, %cst_8 {dimension_numbers = #tpu.dot_dimension_numbers<[1], [0], [0], [1], [0, 0, 1, 1], [], []>} : vector<4x4xf32>, vector<4x256xf32>, vector<4x256xf32> -> vector<4x256xf32>
    %c0_9 = arith.constant 0 : index
    %c0_10 = arith.constant 0 : index
    %9 = vector.load %arg3[%c0_9, %c0_10] : memref<4x1xf32, #tpu.memory_space<vmem>>, vector<4x1xf32>
    %10 = vector.broadcast %9 : vector<4x1xf32> to vector<4x256xf32>
    %11 = arith.addf %8, %10 : vector<4x256xf32>
    %cst_11 = arith.constant 2.000000e+01 : f32
    %12 = vector.broadcast %cst_11 : f32 to vector<4x256xf32>
    %13 = arith.minimumf %11, %12 : vector<4x256xf32>
    %14 = math.exp %13 : vector<4x256xf32>
    %cst_12 = arith.constant 2.000000e+00 : f32
    %15 = vector.broadcast %cst_12 : f32 to vector<4x256xf32>
    %16 = arith.addf %14, %15 : vector<4x256xf32>
    %17 = arith.mulf %14, %16 : vector<4x256xf32>
    %cst_13 = arith.constant 2.000000e+00 : f32
    %18 = vector.broadcast %cst_13 : f32 to vector<4x256xf32>
    %19 = arith.addf %17, %18 : vector<4x256xf32>
    %20 = tpu.reciprocal %19 {approx = true} : vector<4x256xf32> -> vector<4x256xf32>
    %21 = arith.mulf %17, %20 : vector<4x256xf32>
    %cst_14 = arith.constant 2.000000e+01 : f32
    %22 = vector.broadcast %cst_14 : f32 to vector<4x256xf32>
    %23 = arith.cmpf ogt, %11, %22 : vector<4x256xf32>
    %cst_15 = arith.constant 1.000000e+00 : f32
    %24 = vector.broadcast %cst_15 : f32 to vector<4x256xf32>
    %25 = arith.select %23, %24, %21 : vector<4x256xi1>, vector<4x256xf32>
    %26 = arith.mulf %11, %25 : vector<4x256xf32>
    %cst_16 = arith.constant 0.000000e+00 : f32
    %27 = vector.broadcast %cst_16 : f32 to vector<4x290xf32>
    %c0_17 = arith.constant 0 : index
    %c0_18 = arith.constant 0 : index
    %28 = vector.load %arg11[%c0_17, %c0_18] : memref<4x290xf32, #tpu.memory_space<vmem>>, vector<4x290xf32>
    tpu.vector_store %arg11[%c0_17, %c0_18], %27 {strides = array<i32>} : memref<4x290xf32, #tpu.memory_space<vmem>>, vector<4x290xf32>,
    %c0_19 = arith.constant 0 : index
    %c17 = arith.constant 17 : index
    %29 = vector.load %arg11[%c0_19, %c17] : memref<4x290xf32, #tpu.memory_space<vmem>>, vector<4x256xf32>
    tpu.vector_store %arg11[%c0_19, %c17], %26 {strides = array<i32>} : memref<4x290xf32, #tpu.memory_space<vmem>>, vector<4x256xf32>,
    %30 = tpu.iota {dimensions = array<i32: 1>} : vector<1x256xi32>
    %c16_i32 = arith.constant 16 : i32
    %c0_i32 = arith.constant 0 : i32
    %31 = arith.cmpi eq, %c16_i32, %c0_i32 : i32
    %c1_i32 = arith.constant 1 : i32
    %32 = arith.select %31, %c1_i32, %c16_i32 : i32
    %33 = vector.broadcast %32 : i32 to vector<1x256xi32>
    %34 = arith.remsi %30, %33 : vector<1x256xi32>
    %c0_i32_20 = arith.constant 0 : i32
    %35 = vector.broadcast %c0_i32_20 : i32 to vector<1x256xi32>
    %36 = arith.cmpi ne, %34, %35 : vector<1x256xi32>
    %c0_i32_21 = arith.constant 0 : i32
    %37 = vector.broadcast %c0_i32_21 : i32 to vector<1x256xi32>
    %38 = arith.cmpi slt, %34, %37 : vector<1x256xi32>
    %c0_i32_22 = arith.constant 0 : i32
    %39 = arith.cmpi slt, %32, %c0_i32_22 : i32
    %40 = vector.broadcast %39 : i1 to vector<1x256xi1>
    %41 = vector.broadcast %40 : vector<1x256xi1> to vector<1x256xi1>
    %42 = arith.xori %38, %41 : vector<1x256xi1>
    %43 = arith.andi %42, %36 : vector<1x256xi1>
    %44 = vector.broadcast %32 : i32 to vector<1x256xi32>
    %45 = arith.addi %34, %44 : vector<1x256xi32>
    %46 = arith.select %43, %45, %34 : vector<1x256xi1>, vector<1x256xi32>
    %c1_i32_23 = arith.constant 1 : i32
    %47 = vector.broadcast %c1_i32_23 : i32 to vector<1x256xi32>
    %48 = arith.cmpi sge, %46, %47 : vector<1x256xi32>
    %49 = arith.extui %48 : vector<1x256xi1> to vector<1x256xi32>
    %50 = arith.sitofp %49 : vector<1x256xi32> to vector<1x256xf32>
    %c14_i32 = arith.constant 14 : i32
    %51 = vector.broadcast %c14_i32 : i32 to vector<1x256xi32>
    %52 = arith.cmpi sle, %46, %51 : vector<1x256xi32>
    %53 = arith.extui %52 : vector<1x256xi1> to vector<1x256xi32>
    %54 = arith.sitofp %53 : vector<1x256xi32> to vector<1x256xf32>
    %cst_24 = arith.constant 0.000000e+00 : f32
    %55 = vector.broadcast %cst_24 : f32 to vector<4x256xf32>
    %c0_25 = arith.constant 0 : index
    %c0_26 = arith.constant 0 : index
    %56 = vector.load %arg11[%c0_25, %c0_26] : memref<4x290xf32, #tpu.memory_space<vmem>>, vector<4x256xf32>
    %57 = vector.broadcast %50 : vector<1x256xf32> to vector<4x256xf32>
    %58 = arith.mulf %56, %57 : vector<4x256xf32>
    %c0_27 = arith.constant 0 : index
    %c0_28 = arith.constant 0 : index
    %c0_29 = arith.constant 0 : index
    %59 = vector.load %arg4[%c0_27, %c0_28, %c0_29] : memref<9x4x4xf32, #tpu.memory_space<vmem>>, vector<1x4x4xf32>
    %60 = vector.shape_cast %59 : vector<1x4x4xf32> to vector<4x4xf32>
    %cst_30 = arith.constant dense<0.000000e+00> : vector<4x256xf32>
    %61 = tpu.matmul %60, %58, %cst_30 {dimension_numbers = #tpu.dot_dimension_numbers<[1], [0], [0], [1], [0, 0, 1, 1], [], []>} : vector<4x4xf32>, vector<4x256xf32>, vector<4x256xf32> -> vector<4x256xf32>
    %62 = arith.addf %55, %61 : vector<4x256xf32>
    %c0_31 = arith.constant 0 : index
    %c1 = arith.constant 1 : index
    %63 = vector.load %arg11[%c0_31, %c1] : memref<4x290xf32, #tpu.memory_space<vmem>>, vector<4x256xf32>
    %c1_32 = arith.constant 1 : index
    %c0_33 = arith.constant 0 : index
    %c0_34 = arith.constant 0 : index
    %64 = vector.load %arg4[%c1_32, %c0_33, %c0_34] : memref<9x4x4xf32, #tpu.memory_space<vmem>>, vector<1x4x4xf32>
    %65 = vector.shape_cast %64 : vector<1x4x4xf32> to vector<4x4xf32>
    %cst_35 = arith.constant dense<0.000000e+00> : vector<4x256xf32>
    %66 = tpu.matmul %65, %63, %cst_35 {dimension_numbers = #tpu.dot_dimension_numbers<[1], [0], [0], [1], [0, 0, 1, 1], [], []>} : vector<4x4xf32>, vector<4x256xf32>, vector<4x256xf32> -> vector<4x256xf32>
    %67 = arith.addf %62, %66 : vector<4x256xf32>
    %c0_36 = arith.constant 0 : index
    %c2 = arith.constant 2 : index
    %68 = vector.load %arg11[%c0_36, %c2] : memref<4x290xf32, #tpu.memory_space<vmem>>, vector<4x256xf32>
    %69 = vector.broadcast %54 : vector<1x256xf32> to vector<4x256xf32>
    %70 = arith.mulf %68, %69 : vector<4x256xf32>
    %c2_37 = arith.constant 2 : index
    %c0_38 = arith.constant 0 : index
    %c0_39 = arith.constant 0 : index
    %71 = vector.load %arg4[%c2_37, %c0_38, %c0_39] : memref<9x4x4xf32, #tpu.memory_space<vmem>>, vector<1x4x4xf32>
    %72 = vector.shape_cast %71 : vector<1x4x4xf32> to vector<4x4xf32>
    %cst_40 = arith.constant dense<0.000000e+00> : vector<4x256xf32>
    %73 = tpu.matmul %72, %70, %cst_40 {dimension_numbers = #tpu.dot_dimension_numbers<[1], [0], [0], [1], [0, 0, 1, 1], [], []>} : vector<4x4xf32>, vector<4x256xf32>, vector<4x256xf32> -> vector<4x256xf32>
    %74 = arith.addf %67, %73 : vector<4x256xf32>
    %c0_41 = arith.constant 0 : index
    %c16 = arith.constant 16 : index
    %75 = vector.load %arg11[%c0_41, %c16] : memref<4x290xf32, #tpu.memory_space<vmem>>, vector<4x256xf32>
    %76 = vector.broadcast %50 : vector<1x256xf32> to vector<4x256xf32>
    %77 = arith.mulf %75, %76 : vector<4x256xf32>
    %c3 = arith.constant 3 : index
    %c0_42 = arith.constant 0 : index
    %c0_43 = arith.constant 0 : index
    %78 = vector.load %arg4[%c3, %c0_42, %c0_43] : memref<9x4x4xf32, #tpu.memory_space<vmem>>, vector<1x4x4xf32>
    %79 = vector.shape_cast %78 : vector<1x4x4xf32> to vector<4x4xf32>
    %cst_44 = arith.constant dense<0.000000e+00> : vector<4x256xf32>
    %80 = tpu.matmul %79, %77, %cst_44 {dimension_numbers = #tpu.dot_dimension_numbers<[1], [0], [0], [1], [0, 0, 1, 1], [], []>} : vector<4x4xf32>, vector<4x256xf32>, vector<4x256xf32> -> vector<4x256xf32>
    %81 = arith.addf %74, %80 : vector<4x256xf32>
    %c0_45 = arith.constant 0 : index
    %c17_46 = arith.constant 17 : index
    %82 = vector.load %arg11[%c0_45, %c17_46] : memref<4x290xf32, #tpu.memory_space<vmem>>, vector<4x256xf32>
    %c4 = arith.constant 4 : index
    %c0_47 = arith.constant 0 : index
    %c0_48 = arith.constant 0 : index
    %83 = vector.load %arg4[%c4, %c0_47, %c0_48] : memref<9x4x4xf32, #tpu.memory_space<vmem>>, vector<1x4x4xf32>
    %84 = vector.shape_cast %83 : vector<1x4x4xf32> to vector<4x4xf32>
    %cst_49 = arith.constant dense<0.000000e+00> : vector<4x256xf32>
    %85 = tpu.matmul %84, %82, %cst_49 {dimension_numbers = #tpu.dot_dimension_numbers<[1], [0], [0], [1], [0, 0, 1, 1], [], []>} : vector<4x4xf32>, vector<4x256xf32>, vector<4x256xf32> -> vector<4x256xf32>
    %86 = arith.addf %81, %85 : vector<4x256xf32>
    %c0_50 = arith.constant 0 : index
    %c18 = arith.constant 18 : index
    %87 = vector.load %arg11[%c0_50, %c18] : memref<4x290xf32, #tpu.memory_space<vmem>>, vector<4x256xf32>
    %88 = vector.broadcast %54 : vector<1x256xf32> to vector<4x256xf32>
    %89 = arith.mulf %87, %88 : vector<4x256xf32>
    %c5 = arith.constant 5 : index
    %c0_51 = arith.constant 0 : index
    %c0_52 = arith.constant 0 : index
    %90 = vector.load %arg4[%c5, %c0_51, %c0_52] : memref<9x4x4xf32, #tpu.memory_space<vmem>>, vector<1x4x4xf32>
    %91 = vector.shape_cast %90 : vector<1x4x4xf32> to vector<4x4xf32>
    %cst_53 = arith.constant dense<0.000000e+00> : vector<4x256xf32>
    %92 = tpu.matmul %91, %89, %cst_53 {dimension_numbers = #tpu.dot_dimension_numbers<[1], [0], [0], [1], [0, 0, 1, 1], [], []>} : vector<4x4xf32>, vector<4x256xf32>, vector<4x256xf32> -> vector<4x256xf32>
    %93 = arith.addf %86, %92 : vector<4x256xf32>
    %c0_54 = arith.constant 0 : index
    %c32 = arith.constant 32 : index
    %94 = vector.load %arg11[%c0_54, %c32] : memref<4x290xf32, #tpu.memory_space<vmem>>, vector<4x256xf32>
    %95 = vector.broadcast %50 : vector<1x256xf32> to vector<4x256xf32>
    %96 = arith.mulf %94, %95 : vector<4x256xf32>
    %c6 = arith.constant 6 : index
    %c0_55 = arith.constant 0 : index
    %c0_56 = arith.constant 0 : index
    %97 = vector.load %arg4[%c6, %c0_55, %c0_56] : memref<9x4x4xf32, #tpu.memory_space<vmem>>, vector<1x4x4xf32>
    %98 = vector.shape_cast %97 : vector<1x4x4xf32> to vector<4x4xf32>
    %cst_57 = arith.constant dense<0.000000e+00> : vector<4x256xf32>
    %99 = tpu.matmul %98, %96, %cst_57 {dimension_numbers = #tpu.dot_dimension_numbers<[1], [0], [0], [1], [0, 0, 1, 1], [], []>} : vector<4x4xf32>, vector<4x256xf32>, vector<4x256xf32> -> vector<4x256xf32>
    %100 = arith.addf %93, %99 : vector<4x256xf32>
    %c0_58 = arith.constant 0 : index
    %c33 = arith.constant 33 : index
    %101 = vector.load %arg11[%c0_58, %c33] : memref<4x290xf32, #tpu.memory_space<vmem>>, vector<4x256xf32>
    %c7 = arith.constant 7 : index
    %c0_59 = arith.constant 0 : index
    %c0_60 = arith.constant 0 : index
    %102 = vector.load %arg4[%c7, %c0_59, %c0_60] : memref<9x4x4xf32, #tpu.memory_space<vmem>>, vector<1x4x4xf32>
    %103 = vector.shape_cast %102 : vector<1x4x4xf32> to vector<4x4xf32>
    %cst_61 = arith.constant dense<0.000000e+00> : vector<4x256xf32>
    %104 = tpu.matmul %103, %101, %cst_61 {dimension_numbers = #tpu.dot_dimension_numbers<[1], [0], [0], [1], [0, 0, 1, 1], [], []>} : vector<4x4xf32>, vector<4x256xf32>, vector<4x256xf32> -> vector<4x256xf32>
    %105 = arith.addf %100, %104 : vector<4x256xf32>
    %c0_62 = arith.constant 0 : index
    %c34 = arith.constant 34 : index
    %106 = vector.load %arg11[%c0_62, %c34] : memref<4x290xf32, #tpu.memory_space<vmem>>, vector<4x256xf32>
    %107 = vector.broadcast %54 : vector<1x256xf32> to vector<4x256xf32>
    %108 = arith.mulf %106, %107 : vector<4x256xf32>
    %c8 = arith.constant 8 : index
    %c0_63 = arith.constant 0 : index
    %c0_64 = arith.constant 0 : index
    %109 = vector.load %arg4[%c8, %c0_63, %c0_64] : memref<9x4x4xf32, #tpu.memory_space<vmem>>, vector<1x4x4xf32>
    %110 = vector.shape_cast %109 : vector<1x4x4xf32> to vector<4x4xf32>
    %cst_65 = arith.constant dense<0.000000e+00> : vector<4x256xf32>
    %111 = tpu.matmul %110, %108, %cst_65 {dimension_numbers = #tpu.dot_dimension_numbers<[1], [0], [0], [1], [0, 0, 1, 1], [], []>} : vector<4x4xf32>, vector<4x256xf32>, vector<4x256xf32> -> vector<4x256xf32>
    %112 = arith.addf %105, %111 : vector<4x256xf32>
    %c0_66 = arith.constant 0 : index
    %c0_67 = arith.constant 0 : index
    %113 = vector.load %arg5[%c0_66, %c0_67] : memref<4x1xf32, #tpu.memory_space<vmem>>, vector<4x1xf32>
    %114 = vector.broadcast %113 : vector<4x1xf32> to vector<4x256xf32>
    %115 = arith.addf %112, %114 : vector<4x256xf32>
    %cst_68 = arith.constant 2.000000e+01 : f32
    %116 = vector.broadcast %cst_68 : f32 to vector<4x256xf32>
    %117 = arith.minimumf %115, %116 : vector<4x256xf32>
    %118 = math.exp %117 : vector<4x256xf32>
    %cst_69 = arith.constant 2.000000e+00 : f32
    %119 = vector.broadcast %cst_69 : f32 to vector<4x256xf32>
    %120 = arith.addf %118, %119 : vector<4x256xf32>
    %121 = arith.mulf %118, %120 : vector<4x256xf32>
    %cst_70 = arith.constant 2.000000e+00 : f32
    %122 = vector.broadcast %cst_70 : f32 to vector<4x256xf32>
    %123 = arith.addf %121, %122 : vector<4x256xf32>
    %124 = tpu.reciprocal %123 {approx = true} : vector<4x256xf32> -> vector<4x256xf32>
    %125 = arith.mulf %121, %124 : vector<4x256xf32>
    %cst_71 = arith.constant 2.000000e+01 : f32
    %126 = vector.broadcast %cst_71 : f32 to vector<4x256xf32>
    %127 = arith.cmpf ogt, %115, %126 : vector<4x256xf32>
    %cst_72 = arith.constant 1.000000e+00 : f32
    %128 = vector.broadcast %cst_72 : f32 to vector<4x256xf32>
    %129 = arith.select %127, %128, %125 : vector<4x256xi1>, vector<4x256xf32>
    %130 = arith.mulf %115, %129 : vector<4x256xf32>
    %c0_73 = arith.constant 0 : index
    %c0_74 = arith.constant 0 : index
    %131 = vector.load %arg6[%c0_73, %c0_74] : memref<8x4xf32, #tpu.memory_space<vmem>>, vector<8x4xf32>
    %cst_75 = arith.constant dense<0.000000e+00> : vector<8x256xf32>
    %132 = tpu.matmul %131, %130, %cst_75 {dimension_numbers = #tpu.dot_dimension_numbers<[1], [0], [0], [1], [0, 0, 1, 1], [], []>} : vector<8x4xf32>, vector<4x256xf32>, vector<8x256xf32> -> vector<8x256xf32>
    %c0_76 = arith.constant 0 : index
    %c0_77 = arith.constant 0 : index
    %133 = vector.load %arg7[%c0_76, %c0_77] : memref<8x1xf32, #tpu.memory_space<vmem>>, vector<8x1xf32>
    %134 = vector.broadcast %133 : vector<8x1xf32> to vector<8x256xf32>
    %135 = arith.addf %132, %134 : vector<8x256xf32>
    %136 = arith.addf %135, %6 : vector<8x256xf32>
    %cst_78 = arith.constant dense<0.000000e+00> : vector<8xf32>
    %137 = vector.multi_reduction <add>, %136, %cst_78 [1] : vector<8x256xf32> to vector<8xf32>
    %138 = vector.shape_cast %137 : vector<8xf32> to vector<8x1xf32>
    %cst_79 = arith.constant 2.560000e+02 : f32
    %139 = vector.broadcast %cst_79 : f32 to vector<8x1xf32>
    %140 = arith.divf %138, %139 : vector<8x1xf32>
    %141 = vector.broadcast %140 : vector<8x1xf32> to vector<8x256xf32>
    %142 = arith.subf %136, %141 : vector<8x256xf32>
    %143 = arith.mulf %142, %142 : vector<8x256xf32>
    %cst_80 = arith.constant dense<0.000000e+00> : vector<8xf32>
    %144 = vector.multi_reduction <add>, %143, %cst_80 [1] : vector<8x256xf32> to vector<8xf32>
    %145 = vector.shape_cast %144 : vector<8xf32> to vector<8x1xf32>
    %cst_81 = arith.constant 2.560000e+02 : f32
    %146 = vector.broadcast %cst_81 : f32 to vector<8x1xf32>
    %147 = arith.divf %145, %146 : vector<8x1xf32>
    %148 = vector.broadcast %140 : vector<8x1xf32> to vector<8x256xf32>
    %149 = arith.subf %136, %148 : vector<8x256xf32>
    %cst_82 = arith.constant 9.99999974E-6 : f32
    %150 = vector.broadcast %cst_82 : f32 to vector<8x1xf32>
    %151 = arith.addf %147, %150 : vector<8x1xf32>
    %152 = math.rsqrt %151 : vector<8x1xf32>
    %153 = vector.broadcast %152 : vector<8x1xf32> to vector<8x256xf32>
    %154 = arith.mulf %149, %153 : vector<8x256xf32>
    %cst_83 = arith.constant 2.000000e+01 : f32
    %155 = vector.broadcast %cst_83 : f32 to vector<8x256xf32>
    %156 = arith.minimumf %154, %155 : vector<8x256xf32>
    %157 = math.exp %156 : vector<8x256xf32>
    %cst_84 = arith.constant 2.000000e+00 : f32
    %158 = vector.broadcast %cst_84 : f32 to vector<8x256xf32>
    %159 = arith.addf %157, %158 : vector<8x256xf32>
    %160 = arith.mulf %157, %159 : vector<8x256xf32>
    %cst_85 = arith.constant 2.000000e+00 : f32
    %161 = vector.broadcast %cst_85 : f32 to vector<8x256xf32>
    %162 = arith.addf %160, %161 : vector<8x256xf32>
    %163 = tpu.reciprocal %162 {approx = true} : vector<8x256xf32> -> vector<8x256xf32>
    %164 = arith.mulf %160, %163 : vector<8x256xf32>
    %cst_86 = arith.constant 2.000000e+01 : f32
    %165 = vector.broadcast %cst_86 : f32 to vector<8x256xf32>
    %166 = arith.cmpf ogt, %154, %165 : vector<8x256xf32>
    %cst_87 = arith.constant 1.000000e+00 : f32
    %167 = vector.broadcast %cst_87 : f32 to vector<8x256xf32>
    %168 = arith.select %166, %167, %164 : vector<8x256xi1>, vector<8x256xf32>
    %169 = arith.mulf %154, %168 : vector<8x256xf32>
    %c0_88 = arith.constant 0 : index
    %c0_89 = arith.constant 0 : index
    %c0_90 = arith.constant 0 : index
    %170 = vector.load %arg10[%c0_88, %c0_89, %c0_90] : memref<1x8x256xf32, #tpu.memory_space<vmem>>, vector<1x8x256xf32>
    %171 = vector.shape_cast %170 : vector<1x8x256xf32> to vector<8x256xf32>
    %172 = vector.shape_cast %169 : vector<8x256xf32> to vector<1x8x256xf32>
    tpu.vector_store %arg10[%c0_88, %c0_89, %c0_90], %172 {strides = array<i32>} : memref<1x8x256xf32, #tpu.memory_space<vmem>>, vector<1x8x256xf32>,
    return
  }
  func.func @transform_0(%arg0: i32) -> (i32, i32, i32) {
    %c0_i32 = arith.constant 0 : i32
    %c0_i32_0 = arith.constant 0 : i32
    %c0_i32_1 = arith.constant 0 : i32
    return %arg0, %c0_i32, %c0_i32_0 : i32, i32, i32
  }
  func.func @transform_1(%arg0: i32) -> (i32, i32) {
    %c0_i32 = arith.constant 0 : i32
    %c0_i32_0 = arith.constant 0 : i32
    %c0_i32_1 = arith.constant 0 : i32
    return %c0_i32, %c0_i32_0 : i32, i32
  }
  func.func @transform_2(%arg0: i32) -> (i32, i32) {
    %c0_i32 = arith.constant 0 : i32
    %c0_i32_0 = arith.constant 0 : i32
    %c0_i32_1 = arith.constant 0 : i32
    return %c0_i32, %c0_i32_0 : i32, i32
  }
  func.func @transform_3(%arg0: i32) -> (i32, i32, i32) {
    %c0_i32 = arith.constant 0 : i32
    %c0_i32_0 = arith.constant 0 : i32
    %c0_i32_1 = arith.constant 0 : i32
    %c0_i32_2 = arith.constant 0 : i32
    return %c0_i32, %c0_i32_0, %c0_i32_1 : i32, i32, i32
  }
  func.func @transform_4(%arg0: i32) -> (i32, i32) {
    %c0_i32 = arith.constant 0 : i32
    %c0_i32_0 = arith.constant 0 : i32
    %c0_i32_1 = arith.constant 0 : i32
    return %c0_i32, %c0_i32_0 : i32, i32
  }
  func.func @transform_5(%arg0: i32) -> (i32, i32) {
    %c0_i32 = arith.constant 0 : i32
    %c0_i32_0 = arith.constant 0 : i32
    %c0_i32_1 = arith.constant 0 : i32
    return %c0_i32, %c0_i32_0 : i32, i32
  }
  func.func @transform_6(%arg0: i32) -> (i32, i32) {
    %c0_i32 = arith.constant 0 : i32
    %c0_i32_0 = arith.constant 0 : i32
    %c0_i32_1 = arith.constant 0 : i32
    return %c0_i32, %c0_i32_0 : i32, i32
  }
  func.func @transform_7(%arg0: i32) -> (i32, i32) {
    %c0_i32 = arith.constant 0 : i32
    %c0_i32_0 = arith.constant 0 : i32
    %c0_i32_1 = arith.constant 0 : i32
    return %c0_i32, %c0_i32_0 : i32, i32
  }
  func.func @transform_8(%arg0: i32) -> (i32, i32) {
    %c0_i32 = arith.constant 0 : i32
    %c0_i32_0 = arith.constant 0 : i32
    %c0_i32_1 = arith.constant 0 : i32
    return %c0_i32, %c0_i32_0 : i32, i32
  }
  func.func @transform_9(%arg0: i32) -> (i32, i32, i32) {
    %c0_i32 = arith.constant 0 : i32
    %c0_i32_0 = arith.constant 0 : i32
    %c0_i32_1 = arith.constant 0 : i32
    return %arg0, %c0_i32, %c0_i32_0 : i32, i32, i32
  }
}

</mosaic_0001>

<llo_original>
// kernel: tpu_custom_call.1
$region0: #{tpu_custom_call.1}
  #allocation0 [shape = 'u32[]', space=smem, size = 0x4, offset = 0x4, fixed_abs, tag = 'smem constant byte address 0x4 - core index']
  #allocation1 [shape = 'u32[144,128]{1,0:T(1,128)}', space=vmem, size = 0x12000, scoped, tag = 'internal scratch']
  #allocation2 [shape = 'f32[4,290]{1,0:T(4,128)}', space=vmem, size = 0x1800, scoped, tag = 'scratch operand']
  %s0 = inlined_call_operand.vmem [shape: f32[2,4,256], index: 0, kind: input, shape index: {}]
  %s1 = inlined_call_operand.vmem [shape: f32[4,4], index: 1, kind: input, shape index: {}]
  %s2 = inlined_call_operand.vmem [shape: f32[4,1], index: 2, kind: input, shape index: {}]
  %s3 = inlined_call_operand.vmem [shape: f32[9,4,4], index: 3, kind: input, shape index: {}]
  %s4 = inlined_call_operand.vmem [shape: f32[4,1], index: 4, kind: input, shape index: {}]
  %s5 = inlined_call_operand.vmem [shape: f32[8,4], index: 5, kind: input, shape index: {}]
  %s6 = inlined_call_operand.vmem [shape: f32[8,1], index: 6, kind: input, shape index: {}]
  %s7 = inlined_call_operand.vmem [shape: f32[8,4], index: 7, kind: input, shape index: {}]
  %s8 = inlined_call_operand.vmem [shape: f32[8,1], index: 8, kind: input, shape index: {}]
  %s9 = inlined_call_operand.hbm [shape: f32[2,8,256], index: 9, kind: output, shape index: {}]
  %s10 = sld [smem:[#allocation0]]
  $region69: #{tpu_custom_call.1} parent=0
    _
  %s12 = ssub.s32 1, %s10
  %s13 = scalar_select 0, %s12, %s10
  $region1: #{tpu_custom_call.1} parent=0
    #allocation3 [shape = 'u8[16384]{0}', space=vmem, size = 0x4000, scoped, tag = 'output window, operand 0']
    #allocation4 [shape = 's32[2]{0}', space=sflag, size = 0x8, scoped, tag = 'scoped memory for tpu_custom_call.1']
    %14 = vsyncpa [#allocation4], 0
    %s15 = scalar_lea.sflag [#allocation4], 1
    %16 = vsyncpa %s15, 0
    loop: start=0, step=1, limit=4
    $region2: #{tpu_custom_call.1} parent=1 // loop_pre_header
      _
    $region3: #{tpu_custom_call.1} parent=1 // loop_header
      %s18 = sphi 0, %s22
      %p19 = scmp.ge.s32.totalorder %s18, 4
      %s28 = sphi 0, %s30
      %s31 = sphi 0, %s28
      %s32 = sphi 0, %s31
      %s48 = sphi 0, %s32
      %s52 = sphi 0, %s52
      %s54 = sphi 0, %s52
      %s55 = sphi 0, %s54
      %s69 = sphi 0, %s55
      %s73 = sphi 0, %s73
      %s75 = sphi 0, %s73
      %s76 = sphi 0, %s75
      %s90 = sphi 0, %s76
      %s94 = sphi 0, %s94
      %s96 = sphi 0, %s94
      %s97 = sphi 0, %s96
      %s111 = sphi 0, %s97
      %s115 = sphi 0, %s115
      %s117 = sphi 0, %s115
      %s118 = sphi 0, %s117
      %s132 = sphi 0, %s118
      %s136 = sphi 0, %s136
      %s138 = sphi 0, %s136
      %s139 = sphi 0, %s138
      %s153 = sphi 0, %s139
      %s157 = sphi 0, %s157
      %s159 = sphi 0, %s157
      %s160 = sphi 0, %s159
      %s174 = sphi 0, %s160
      %s178 = sphi 0, %s178
      %s180 = sphi 0, %s178
      %s181 = sphi 0, %s180
      %s195 = sphi 0, %s181
      %s199 = sphi 0, %s199
      %s201 = sphi 0, %s199
      %s202 = sphi 0, %s201
      %s216 = sphi 0, %s202
      %s222 = sphi 0, %s224
      %s225 = sphi 0, %s222
      %s226 = sphi 0, %s225
      %s242 = sphi 0, %s226
    $region4: #{tpu_custom_call.1} parent=1 // loop_header_branch
      %21 = sbr.rel (%p19) target = $region8
    $region5: #{tpu_custom_call.1} parent=1 // loop_body
      %s23 = ssub.s32 %s18, 1
      %s24 = ssub.s32 %s18, 2
      %s25 = sadd.s32 %s18, 1
      %s26 = ssub.s32 %s18, %s25
      %p27 = scmp.eq.s32.totalorder %s26, 0
      %s29 = sadd.s32 %s28, 1
      %s30 = scalar_select %p27, %s28, %s29
      %p33 = pneg %p27
      %p34 = scmp.eq.s32.totalorder %s18, 1
      %p35 = por %p33, %p34
      %p36 = scmp.ne.s32.totalorder %s28, %s31
      %p37 = scmp.eq.s32.totalorder %s18, 0
      %p38 = por %p36, %p37
      %p39 = scmp.ne.s32.totalorder %s28, %s31
      %p40 = scmp.eq.s32.totalorder %s23, 1
      %p41 = por %p39, %p40
      %p42 = scmp.ne.s32.totalorder %s31, %s32
      %p43 = scmp.eq.s32.totalorder %s23, 0
      %p44 = por %p42, %p43
      %p45 = scmp.ne.s32.totalorder %s31, %s32
      %p46 = scmp.eq.s32.totalorder %s24, 1
      %p47 = por %p45, %p46
      %p49 = scmp.ne.s32.totalorder %s32, %s48
      %p50 = scmp.eq.s32.totalorder %s24, 0
      %p51 = por %p49, %p50
      %s53 = sadd.s32 %s52, 1
      %p56 = scmp.eq.s32.totalorder %s18, 1
      %p57 = scmp.ne.s32.totalorder %s52, %s54
      %p58 = scmp.eq.s32.totalorder %s18, 0
      %p59 = por %p57, %p58
      %p60 = scmp.ne.s32.totalorder %s52, %s54
      %p61 = scmp.eq.s32.totalorder %s23, 1
      %p62 = por %p60, %p61
      %p63 = scmp.ne.s32.totalorder %s54, %s55
      %p64 = scmp.eq.s32.totalorder %s23, 0
      %p65 = por %p63, %p64
      %p66 = scmp.ne.s32.totalorder %s54, %s55
      %p67 = scmp.eq.s32.totalorder %s24, 1
      %p68 = por %p66, %p67
      %p70 = scmp.ne.s32.totalorder %s55, %s69
      %p71 = scmp.eq.s32.totalorder %s24, 0
      %p72 = por %p70, %p71
      %s74 = sadd.s32 %s73, 1
      %p77 = scmp.eq.s32.totalorder %s18, 1
      %p78 = scmp.ne.s32.totalorder %s73, %s75
      %p79 = scmp.eq.s32.totalorder %s18, 0
      %p80 = por %p78, %p79
      %p81 = scmp.ne.s32.totalorder %s73, %s75
      %p82 = scmp.eq.s32.totalorder %s23, 1
      %p83 = por %p81, %p82
      %p84 = scmp.ne.s32.totalorder %s75, %s76
      %p85 = scmp.eq.s32.totalorder %s23, 0
      %p86 = por %p84, %p85
      %p87 = scmp.ne.s32.totalorder %s75, %s76
      %p88 = scmp.eq.s32.totalorder %s24, 1
      %p89 = por %p87, %p88
      %p91 = scmp.ne.s32.totalorder %s76, %s90
      %p92 = scmp.eq.s32.totalorder %s24, 0
      %p93 = por %p91, %p92
      %s95 = sadd.s32 %s94, 1
      %p98 = scmp.eq.s32.totalorder %s18, 1
      %p99 = scmp.ne.s32.totalorder %s94, %s96
      %p100 = scmp.eq.s32.totalorder %s18, 0
      %p101 = por %p99, %p100
      %p102 = scmp.ne.s32.totalorder %s94, %s96
      %p103 = scmp.eq.s32.totalorder %s23, 1
      %p104 = por %p102, %p103
      %p105 = scmp.ne.s32.totalorder %s96, %s97
      %p106 = scmp.eq.s32.totalorder %s23, 0
      %p107 = por %p105, %p106
      %p108 = scmp.ne.s32.totalorder %s96, %s97
      %p109 = scmp.eq.s32.totalorder %s24, 1
      %p110 = por %p108, %p109
      %p112 = scmp.ne.s32.totalorder %s97, %s111
      %p113 = scmp.eq.s32.totalorder %s24, 0
      %p114 = por %p112, %p113
      %s116 = sadd.s32 %s115, 1
      %p119 = scmp.eq.s32.totalorder %s18, 1
      %p120 = scmp.ne.s32.totalorder %s115, %s117
      %p121 = scmp.eq.s32.totalorder %s18, 0
      %p122 = por %p120, %p121
      %p123 = scmp.ne.s32.totalorder %s115, %s117
      %p124 = scmp.eq.s32.totalorder %s23, 1
      %p125 = por %p123, %p124
      %p126 = scmp.ne.s32.totalorder %s117, %s118
      %p127 = scmp.eq.s32.totalorder %s23, 0
      %p128 = por %p126, %p127
      %p129 = scmp.ne.s32.totalorder %s117, %s118
      %p130 = scmp.eq.s32.totalorder %s24, 1
      %p131 = por %p129, %p130
      %p133 = scmp.ne.s32.totalorder %s118, %s132
      %p134 = scmp.eq.s32.totalorder %s24, 0
      %p135 = por %p133, %p134
      %s137 = sadd.s32 %s136, 1
      %p140 = scmp.eq.s32.totalorder %s18, 1
      %p141 = scmp.ne.s32.totalorder %s136, %s138
      %p142 = scmp.eq.s32.totalorder %s18, 0
      %p143 = por %p141, %p142
      %p144 = scmp.ne.s32.totalorder %s136, %s138
      %p145 = scmp.eq.s32.totalorder %s23, 1
      %p146 = por %p144, %p145
      %p147 = scmp.ne.s32.totalorder %s138, %s139
      %p148 = scmp.eq.s32.totalorder %s23, 0
      %p149 = por %p147, %p148
      %p150 = scmp.ne.s32.totalorder %s138, %s139
      %p151 = scmp.eq.s32.totalorder %s24, 1
      %p152 = por %p150, %p151
      %p154 = scmp.ne.s32.totalorder %s139, %s153
      %p155 = scmp.eq.s32.totalorder %s24, 0
      %p156 = por %p154, %p155
      %s158 = sadd.s32 %s157, 1
      %p161 = scmp.eq.s32.totalorder %s18, 1
      %p162 = scmp.ne.s32.totalorder %s157, %s159
      %p163 = scmp.eq.s32.totalorder %s18, 0
      %p164 = por %p162, %p163
      %p165 = scmp.ne.s32.totalorder %s157, %s159
      %p166 = scmp.eq.s32.totalorder %s23, 1
      %p167 = por %p165, %p166
      %p168 = scmp.ne.s32.totalorder %s159, %s160
      %p169 = scmp.eq.s32.totalorder %s23, 0
      %p170 = por %p168, %p169
      %p171 = scmp.ne.s32.totalorder %s159, %s160
      %p172 = scmp.eq.s32.totalorder %s24, 1
      %p173 = por %p171, %p172
      %p175 = scmp.ne.s32.totalorder %s160, %s174
      %p176 = scmp.eq.s32.totalorder %s24, 0
      %p177 = por %p175, %p176
      %s179 = sadd.s32 %s178, 1
      %p182 = scmp.eq.s32.totalorder %s18, 1
      %p183 = scmp.ne.s32.totalorder %s178, %s180
      %p184 = scmp.eq.s32.totalorder %s18, 0
      %p185 = por %p183, %p184
      %p186 = scmp.ne.s32.totalorder %s178, %s180
      %p187 = scmp.eq.s32.totalorder %s23, 1
      %p188 = por %p186, %p187
      %p189 = scmp.ne.s32.totalorder %s180, %s181
      %p190 = scmp.eq.s32.totalorder %s23, 0
      %p191 = por %p189, %p190
      %p192 = scmp.ne.s32.totalorder %s180, %s181
      %p193 = scmp.eq.s32.totalorder %s24, 1
      %p194 = por %p192, %p193
      %p196 = scmp.ne.s32.totalorder %s181, %s195
      %p197 = scmp.eq.s32.totalorder %s24, 0
      %p198 = por %p196, %p197
      %s200 = sadd.s32 %s199, 1
      %p203 = scmp.eq.s32.totalorder %s18, 1
      %p204 = scmp.ne.s32.totalorder %s199, %s201
      %p205 = scmp.eq.s32.totalorder %s18, 0
      %p206 = por %p204, %p205
      %p207 = scmp.ne.s32.totalorder %s199, %s201
      %p208 = scmp.eq.s32.totalorder %s23, 1
      %p209 = por %p207, %p208
      %p210 = scmp.ne.s32.totalorder %s201, %s202
      %p211 = scmp.eq.s32.totalorder %s23, 0
      %p212 = por %p210, %p211
      %p213 = scmp.ne.s32.totalorder %s201, %s202
      %p214 = scmp.eq.s32.totalorder %s24, 1
      %p215 = por %p213, %p214
      %p217 = scmp.ne.s32.totalorder %s202, %s216
      %p218 = scmp.eq.s32.totalorder %s24, 0
      %p219 = por %p217, %p218
      %s220 = ssub.s32 %s18, %s25
      %p221 = scmp.eq.s32.totalorder %s220, 0
      %s223 = sadd.s32 %s222, 1
      %s224 = scalar_select %p221, %s222, %s223
      %p227 = pneg %p221
      %p228 = scmp.eq.s32.totalorder %s18, 1
      %p229 = por %p227, %p228
      %p230 = scmp.ne.s32.totalorder %s222, %s225
      %p231 = scmp.eq.s32.totalorder %s18, 0
      %p232 = por %p230, %p231
      %p233 = scmp.ne.s32.totalorder %s222, %s225
      %p234 = scmp.eq.s32.totalorder %s23, 1
      %p235 = por %p233, %p234
      %p236 = scmp.ne.s32.totalorder %s225, %s226
      %p237 = scmp.eq.s32.totalorder %s23, 0
      %p238 = por %p236, %p237
      %p239 = scmp.ne.s32.totalorder %s225, %s226
      %p240 = scmp.eq.s32.totalorder %s24, 1
      %p241 = por %p239, %p240
      %p243 = scmp.ne.s32.totalorder %s226, %s242
      %p244 = scmp.eq.s32.totalorder %s24, 0
      %p245 = por %p243, %p244
      %p246 = scmp.le.s32.totalorder 1, %s18
      %p247 = scmp.lt.s32.totalorder %s18, 3
      %p248 = pnand %p246, %p247
      %p249 = pneg %p248
      // Predicated region
      $region9: #{tpu_custom_call.1} parent=5 // pred_check
        _
      $region10: #{tpu_custom_call.1} parent=5 // pred_check_branch
        %251 = sbr.rel (%p248) target = $region12
      $region11: #{tpu_custom_call.1} parent=5 // pred_region
        %s252 = ssub.s32 %s18, 1
        // Predicated region
        $region13: #{tpu_custom_call.1} parent=11 // pred_check
          %p253 = pneg %p65
        $region14: #{tpu_custom_call.1} parent=11 // pred_check_branch
          %255 = sbr.rel (%p253) target = $region16
        $region15: #{tpu_custom_call.1} parent=11 // pred_region
          _
        $region16: #{tpu_custom_call.1} parent=11 // pred_fallthru
          _
        // Predicated region
        $region17: #{tpu_custom_call.1} parent=11 // pred_check
          %p256 = pneg %p86
        $region18: #{tpu_custom_call.1} parent=11 // pred_check_branch
          %258 = sbr.rel (%p256) target = $region20
        $region19: #{tpu_custom_call.1} parent=11 // pred_region
          _
        $region20: #{tpu_custom_call.1} parent=11 // pred_fallthru
          _
        // Predicated region
        $region21: #{tpu_custom_call.1} parent=11 // pred_check
          %p259 = pneg %p107
        $region22: #{tpu_custom_call.1} parent=11 // pred_check_branch
          %261 = sbr.rel (%p259) target = $region24
        $region23: #{tpu_custom_call.1} parent=11 // pred_region
          _
        $region24: #{tpu_custom_call.1} parent=11 // pred_fallthru
          _
        // Predicated region
        $region25: #{tpu_custom_call.1} parent=11 // pred_check
          %p262 = pneg %p128
        $region26: #{tpu_custom_call.1} parent=11 // pred_check_branch
          %264 = sbr.rel (%p262) target = $region28
        $region27: #{tpu_custom_call.1} parent=11 // pred_region
          _
        $region28: #{tpu_custom_call.1} parent=11 // pred_fallthru
          _
        // Predicated region
        $region29: #{tpu_custom_call.1} parent=11 // pred_check
          %p265 = pneg %p149
        $region30: #{tpu_custom_call.1} parent=11 // pred_check_branch
          %267 = sbr.rel (%p265) target = $region32
        $region31: #{tpu_custom_call.1} parent=11 // pred_region
          _
        $region32: #{tpu_custom_call.1} parent=11 // pred_fallthru
          _
        // Predicated region
        $region33: #{tpu_custom_call.1} parent=11 // pred_check
          %p268 = pneg %p170
        $region34: #{tpu_custom_call.1} parent=11 // pred_check_branch
          %270 = sbr.rel (%p268) target = $region36
        $region35: #{tpu_custom_call.1} parent=11 // pred_region
          _
        $region36: #{tpu_custom_call.1} parent=11 // pred_fallthru
          _
        // Predicated region
        $region37: #{tpu_custom_call.1} parent=11 // pred_check
          %p271 = pneg %p191
        $region38: #{tpu_custom_call.1} parent=11 // pred_check_branch
          %273 = sbr.rel (%p271) target = $region40
        $region39: #{tpu_custom_call.1} parent=11 // pred_region
          _
        $region40: #{tpu_custom_call.1} parent=11 // pred_fallthru
          _
        // Predicated region
        $region41: #{tpu_custom_call.1} parent=11 // pred_check
          %p274 = pneg %p212
        $region42: #{tpu_custom_call.1} parent=11 // pred_check_branch
          %276 = sbr.rel (%p274) target = $region44
        $region43: #{tpu_custom_call.1} parent=11 // pred_region
          _
        $region44: #{tpu_custom_call.1} parent=11 // pred_fallthru
          _
      $region12: #{tpu_custom_call.1} parent=5 // pred_fallthru
        _
      %p277 = scmp.lt.s32.totalorder %s18, 2
      // Predicated region
      $region45: #{tpu_custom_call.1} parent=5 // pred_check
        %p278 = pneg %p277
      $region46: #{tpu_custom_call.1} parent=5 // pred_check_branch
        %280 = sbr.rel (%p278) target = $region48
      $region47: #{tpu_custom_call.1} parent=5 // pred_region
        // Predicated region
        $region49: #{tpu_custom_call.1} parent=47 // pred_check
          %p281 = pneg %p38
        $region50: #{tpu_custom_call.1} parent=47 // pred_check_branch
          %283 = sbr.rel (%p281) target = $region52
        $region51: #{tpu_custom_call.1} parent=47 // pred_region
          %p284 = scmp.lt.s32.totalorder %s18, 1
          %s285 = scalar_select %p284, %s18, 1
          %s286 = smul.addr %s285, 2
          %s287 = smul.addr %s286, 4
          %s288 = scalar_lea.vmem %s0, %s287
        $region52: #{tpu_custom_call.1} parent=47 // pred_fallthru
          _
      $region48: #{tpu_custom_call.1} parent=5 // pred_fallthru
        _
      %p289 = scmp.le.s32.totalorder 1, %s18
      %p290 = scmp.lt.s32.totalorder %s18, 3
      %p291 = pnand %p289, %p290
      %p292 = pneg %p291
      // Predicated region
      $region53: #{tpu_custom_call.1} parent=5 // pred_check
        _
      $region54: #{tpu_custom_call.1} parent=5 // pred_check_branch
        %294 = sbr.rel (%p291) target = $region56
      $region55: #{tpu_custom_call.1} parent=5 // pred_region
        %s295 = ssub.s32 %s18, 1
        %p296 = scmp.lt.s32.totalorder %s23, 1
        %s297 = scalar_select %p296, %s23, 1
        %s298 = smul.addr %s297, 2
        %s299 = smul.addr %s298, 4
        %s300 = scalar_lea.vmem %s0, %s299
        %p301 = pneg %p44
        %p302 = pneg %p41
        %p303 = pneg %p65
        %p304 = pneg %p62
        %p305 = pneg %p86
        %p306 = pneg %p83
        %p307 = pneg %p107
        %p308 = pneg %p104
        %p309 = pneg %p128
        %p310 = pneg %p125
        %p311 = pneg %p149
        %p312 = pneg %p146
        %p313 = pneg %p170
        %p314 = pneg %p167
        %p315 = pneg %p191
        %p316 = pneg %p188
        %p317 = pneg %p212
        %p318 = pneg %p209
        %p319 = pneg %p238
        %p320 = pneg %p235
        %s321 = sand.u32 %s225, 1
        %s322 = scalar_lea.sflag [#allocation4], %s321
        %s323 = sand.u32 %s225, 1
        %s324 = smul.addr %s323, 16
        %s325 = scalar_lea.vmem [#allocation3], %s324
        %p326 = scmp.lt.s32.totalorder %s23, 1
        %s327 = scalar_select %p326, %s23, 1
        %s328 = smul.addr %s327, 2
        %s329 = smul.addr %s328, 4
        %s330 = scalar_lea.vmem %s0, %s329
        %v331 = vld [vmem:[%s330] sm:$0xff]
        %v332 = vld [vmem:[%s7] sm:$0xff]
        %v333 = vld [vmem:[%s8] sm:$0xff]
        %335 = vset.pattern.permute.xlu0 0
        %336 = vperm.xlu0 %335, %v333
        %v337 = vpop.permute.xlu0 %336
        %v340 = vcombine.high %v331, %v331
        %vm341 = vcmask 31744
        %v343 = vsel %vm341, %v332, 0
        %vm345 = vcmask 1043456
        %v346 = vsel %vm345, %v331, 0
        %v348 = vsel %vm345, %v340, 0
        %350 = vmatprep.subr.mxu0 %v348
        %351 = vmatpush1.msra.mxu0 %v346
        %352 = vmatprep.subr.mxu0 0.0
        %353 = vmatpush1.msra.mxu0 0.0
        %354 = vmatprep.subr.mxu0 0.0
        %355 = vmatpush1.msra.mxu0 0.0
        %356 = vmatprep.subr.mxu0 0.0
        %357 = vmatpush1.msra.mxu0 0.0
        %358 = vmatprep.subr.mxu0 0.0
        %359 = vmatpush1.msra.mxu0 0.0
        %360 = vmatprep.subr.mxu0 0.0
        %361 = vmatpush1.msra.mxu0 0.0
        %362 = vmatprep.subr.mxu0 0.0
        %363 = vmatpush1.msra.mxu0 0.0
        %364 = vmatprep.subr.mxu0 0.0
        %365 = vmatpush1.msra.mxu0 0.0
        %366 = vmatprep.subr.mxu0 0.0
        %367 = vmatpush1.msra.mxu0 0.0
        %368 = vmatprep.subr.mxu0 0.0
        %369 = vmatpush1.msra.mxu0 0.0
        %370 = vmatprep.subr.mxu0 0.0
        %371 = vmatpush1.msra.mxu0 0.0
        %372 = vmatprep.subr.mxu0 0.0
        %373 = vmatpush1.msra.mxu0 0.0
        %374 = vmatprep.subr.mxu0 0.0
        %375 = vmatpush1.msra.mxu0 0.0
        %376 = vmatprep.subr.mxu0 0.0
        %377 = vmatpush1.msra.mxu0 0.0
        %378 = vmatprep.subr.mxu0 0.0
        %379 = vmatpush1.msra.mxu0 0.0
        %380 = vmatprep.subr.mxu0 0.0
        %381 = vmatpush1.msra.mxu0 0.0
        %382 = vmatprep.subr.mxu0 0.0
        %383 = vmatpush1.msra.mxu0 0.0
        %384 = vmatprep.subr.mxu0 0.0
        %385 = vmatpush1.msra.mxu0 0.0
        %386 = vmatprep.subr.mxu0 0.0
        %387 = vmatpush1.msra.mxu0 0.0
        %388 = vmatprep.subr.mxu0 0.0
        %389 = vmatpush1.msra.mxu0 0.0
        %390 = vmatprep.subr.mxu0 0.0
        %391 = vmatpush1.msra.mxu0 0.0
        %392 = vmatprep.subr.mxu0 0.0
        %393 = vmatpush1.msra.mxu0 0.0
        %394 = vmatprep.subr.mxu0 0.0
        %395 = vmatpush1.msra.mxu0 0.0
        %396 = vmatprep.subr.mxu0 0.0
        %397 = vmatpush1.msra.mxu0 0.0
        %398 = vmatprep.subr.mxu0 0.0
        %399 = vmatpush1.msra.mxu0 0.0
        %400 = vmatprep.subr.mxu0 0.0
        %401 = vmatpush1.msra.mxu0 0.0
        %402 = vmatprep.subr.mxu0 0.0
        %403 = vmatpush1.msra.mxu0 0.0
        %404 = vmatprep.subr.mxu0 0.0
        %405 = vmatpush1.msra.mxu0 0.0
        %406 = vmatprep.subr.mxu0 0.0
        %407 = vmatpush1.msra.mxu0 0.0
        %408 = vmatprep.subr.mxu0 0.0
        %409 = vmatpush1.msra.mxu0 0.0
        %410 = vmatprep.subr.mxu0 0.0
        %411 = vmatpush1.msra.mxu0 0.0
        %412 = vmatprep.subr.mxu0 0.0
        %413 = vmatpush1.msra.mxu0 0.0
        %414 = vmatprep.mubr.f32.mxu0 0.0
        %415 = vmatmul.mubr.f32.gmra.mrb[0].mxu0 %v343
        %v416 = vpop.f32.mrb[0].mxu0
        %v417 = vadd.f32 %v337, %v416
        %v418 = vpop.f32.mrb[0].mxu0
        %v419 = vadd.f32 %v337, %v418
        %420 = vdwg.mxu0
        %v421 = vld [vmem:[%s1] sm:$0xf]
        %v422 = vld [vmem:[%s2] sm:$0xf]
        %424 = vset.pattern.permute.xlu0 0
        %425 = vperm.xlu0 %424, %v422
        %v426 = vpop.permute.xlu0 %425
        %v429 = vsel %vm341, %v421, 0
        %431 = vmatprep.subr.mxu0 %v348
        %432 = vmatpush1.msra.mxu0 %v346
        %433 = vmatprep.subr.mxu0 0.0
        %434 = vmatpush1.msra.mxu0 0.0
        %435 = vmatprep.subr.mxu0 0.0
        %436 = vmatpush1.msra.mxu0 0.0
        %437 = vmatprep.subr.mxu0 0.0
        %438 = vmatpush1.msra.mxu0 0.0
        %439 = vmatprep.subr.mxu0 0.0
        %440 = vmatpush1.msra.mxu0 0.0
        %441 = vmatprep.subr.mxu0 0.0
        %442 = vmatpush1.msra.mxu0 0.0
        %443 = vmatprep.subr.mxu0 0.0
        %444 = vmatpush1.msra.mxu0 0.0
        %445 = vmatprep.subr.mxu0 0.0
        %446 = vmatpush1.msra.mxu0 0.0
        %447 = vmatprep.subr.mxu0 0.0
        %448 = vmatpush1.msra.mxu0 0.0
        %449 = vmatprep.subr.mxu0 0.0
        %450 = vmatpush1.msra.mxu0 0.0
        %451 = vmatprep.subr.mxu0 0.0
        %452 = vmatpush1.msra.mxu0 0.0
        %453 = vmatprep.subr.mxu0 0.0
        %454 = vmatpush1.msra.mxu0 0.0
        %455 = vmatprep.subr.mxu0 0.0
        %456 = vmatpush1.msra.mxu0 0.0
        %457 = vmatprep.subr.mxu0 0.0
        %458 = vmatpush1.msra.mxu0 0.0
        %459 = vmatprep.subr.mxu0 0.0
        %460 = vmatpush1.msra.mxu0 0.0
        %461 = vmatprep.subr.mxu0 0.0
        %462 = vmatpush1.msra.mxu0 0.0
        %463 = vmatprep.subr.mxu0 0.0
        %464 = vmatpush1.msra.mxu0 0.0
        %465 = vmatprep.subr.mxu0 0.0
        %466 = vmatpush1.msra.mxu0 0.0
        %467 = vmatprep.subr.mxu0 0.0
        %468 = vmatpush1.msra.mxu0 0.0
        %469 = vmatprep.subr.mxu0 0.0
        %470 = vmatpush1.msra.mxu0 0.0
        %471 = vmatprep.subr.mxu0 0.0
        %472 = vmatpush1.msra.mxu0 0.0
        %473 = vmatprep.subr.mxu0 0.0
        %474 = vmatpush1.msra.mxu0 0.0
        %475 = vmatprep.subr.mxu0 0.0
        %476 = vmatpush1.msra.mxu0 0.0
        %477 = vmatprep.subr.mxu0 0.0
        %478 = vmatpush1.msra.mxu0 0.0
        %479 = vmatprep.subr.mxu0 0.0
        %480 = vmatpush1.msra.mxu0 0.0
        %481 = vmatprep.subr.mxu0 0.0
        %482 = vmatpush1.msra.mxu0 0.0
        %483 = vmatprep.subr.mxu0 0.0
        %484 = vmatpush1.msra.mxu0 0.0
        %485 = vmatprep.subr.mxu0 0.0
        %486 = vmatpush1.msra.mxu0 0.0
        %487 = vmatprep.subr.mxu0 0.0
        %488 = vmatpush1.msra.mxu0 0.0
        %489 = vmatprep.subr.mxu0 0.0
        %490 = vmatpush1.msra.mxu0 0.0
        %491 = vmatprep.subr.mxu0 0.0
        %492 = vmatpush1.msra.mxu0 0.0
        %493 = vmatprep.subr.mxu0 0.0
        %494 = vmatpush1.msra.mxu0 0.0
        %495 = vmatprep.mubr.f32.mxu0 0.0
        %496 = vmatmul.mubr.f32.gmra.mrb[0].mxu0 %v429
        %v497 = vpop.f32.mrb[0].mxu0
        %v498 = vadd.f32 %v426, %v497
        %v499 = vpop.f32.mrb[0].mxu0
        %v500 = vadd.f32 %v426, %v499
        %501 = vdwg.mxu0
        %v502 = vmin.f32 %v498, 20.0
        %v503 = vmin.f32 %v500, 20.0
        %v504 = vmul.f32 %v502, 1.442695
        %v505 = vpow.pop %v504
        %v506 = vmul.f32 %v503, 1.442695
        %v507 = vpow.pop %v506
        %v508 = vadd.f32 %v505, 2.0
        %v509 = vadd.f32 %v507, 2.0
        %v510 = vmul.f32 %v505, %v508
        %v511 = vmul.f32 %v507, %v509
        %v512 = vadd.f32 %v510, 2.0
        %v513 = vadd.f32 %v511, 2.0
        %v514 = vrcp.pop %v512
        %v515 = vrcp.pop %v513
        %v516 = vmul.f32 %v510, %v514
        %v517 = vmul.f32 %v511, %v515
        %vm518 = vcmp.gt.f32.partialorder %v498, 20.0
        %vm519 = vcmp.gt.f32.partialorder %v500, 20.0
        %v520 = vsel %vm518, 1.0, %v516
        %v521 = vsel %vm519, 1.0, %v517
        %v522 = vmul.f32 %v498, %v520
        %v523 = vmul.f32 %v500, %v521
        %524 = vst [vmem:[#allocation2] sm:$0xff] 0.0
        %vm525 = vcmask 273408
        %526 = vst.msk [vmem:[#allocation2 + $0x8] sm:$0xf] %vm525, 0.0
        %v529 = vcombine.low %v522, %v523
        %530 = vrot.lane.b32.xlu0 %v529, 17
        %v531 = vpop.permute.xlu0 %530
        %v532 = vrot.slane %v531, 4
        %vm533 = vcmask 138240
        %v534 = vsel %vm533, %v532, %v531
        %vm537 = vcmask 1043592
        %vm538 = vcmask 1047556
        %vm539 = vmor %vm538, %vm537
        %540 = vst.msk [vmem:[#allocation2] sm:$0xff] %vm539, %v534
        %vm541 = vcmask 134144
        %542 = vst.msk [vmem:[#allocation2 + $0x8] sm:$0xf] %vm541, %v532
        %v543 = vlaneseq
        %v544 = vand.u32 %v543, 127
        %v545 = vadd.s32 %v544, 128
        %vm546 = vcmp.lt.s32.totalorder %v544, 0
        %v547 = vsub.s32 0, %v544
        %v548 = vsel %vm546, %v547, %v544
        %v549 = vshrl.u32 %v548, 4
        %v550 = vand.u32 %v548, 15
        %v551 = vsub.s32 0, %v550
        %v552 = vsel %vm546, %v551, %v550
        %vm553 = vcmp.lt.s32.totalorder %v545, 0
        %v554 = vsub.s32 0, %v545
        %v555 = vsel %vm553, %v554, %v545
        %v556 = vshrl.u32 %v555, 4
        %v557 = vand.u32 %v555, 15
        %v558 = vsub.s32 0, %v557
        %v559 = vsel %vm553, %v558, %v557
        %vm560 = vcmp.ne.s32.totalorder %v552, 0
        %vm561 = vcmp.ne.s32.totalorder %v559, 0
        %vm562 = vcmp.lt.s32.totalorder %v552, 0
        %vm563 = vcmp.lt.s32.totalorder %v559, 0
        %vm564 = vmand %vm562, %vm560
        %vm565 = vmand %vm563, %vm561
        %v566 = vadd.s32 %v552, 16
        %v567 = vadd.s32 %v559, 16
        %v568 = vsel %vm564, %v566, %v552
        %v569 = vsel %vm565, %v567, %v559
        %vm570 = vcmp.ge.s32.totalorder %v568, 1
        %vm571 = vcmp.ge.s32.totalorder %v569, 1
        %v572 = vsel %vm570, 1, 0
        %v573 = vsel %vm571, 1, 0
        %v574 = vcvt.s32.f32 %v572
        %v575 = vcvt.s32.f32 %v573
        %vm576 = vcmp.le.s32.totalorder %v568, 14
        %vm577 = vcmp.le.s32.totalorder %v569, 14
        %v578 = vsel %vm576, 1, 0
        %v579 = vsel %vm577, 1, 0
        %v580 = vcvt.s32.f32 %v578
        %v581 = vcvt.s32.f32 %v579
        %v582 = vld [vmem:[#allocation2] sm:$0xff]
        %v585 = vcombine.low %v574, %v575
        %v587 = vmul.f32 %v582, %v585
        %v588 = vld [vmem:[%s3] sm:$0xf]
        %v589 = vld [vmem:[#allocation2 + $0x8] sm:$0xf]
        %s590 = scalar_lea.vmem %s3, 4
        %v591 = vld [vmem:[%s590] sm:$0xf]
        %v594 = vcombine.high %v582, %v582
        %595 = vrot.lane.b32.xlu0 %v582, 127
        %v596 = vpop.permute.xlu0 %595
        %597 = vrot.lane.b32.xlu0 %v594, 127
        %v598 = vpop.permute.xlu0 %597
        %599 = vrot.lane.b32.xlu0 %v589, 127
        %v600 = vpop.permute.xlu0 %599
        %vm601 = vcmask 1039360
        %v602 = vsel %vm601, %v596, %v598
        %v603 = vsel %vm601, %v598, %v600
        %v605 = vsel %vm341, %v591, 0
        %v607 = vsel %vm345, %v602, 0
        %v609 = vsel %vm345, %v603, 0
        %611 = vmatprep.subr.mxu0 %v609
        %612 = vmatpush1.msra.mxu0 %v607
        %613 = vmatprep.subr.mxu0 0.0
        %614 = vmatpush1.msra.mxu0 0.0
        %615 = vmatprep.subr.mxu0 0.0
        %616 = vmatpush1.msra.mxu0 0.0
        %617 = vmatprep.subr.mxu0 0.0
        %618 = vmatpush1.msra.mxu0 0.0
        %619 = vmatprep.subr.mxu0 0.0
        %620 = vmatpush1.msra.mxu0 0.0
        %621 = vmatprep.subr.mxu0 0.0
        %622 = vmatpush1.msra.mxu0 0.0
        %623 = vmatprep.subr.mxu0 0.0
        %624 = vmatpush1.msra.mxu0 0.0
        %625 = vmatprep.subr.mxu0 0.0
        %626 = vmatpush1.msra.mxu0 0.0
        %627 = vmatprep.subr.mxu0 0.0
        %628 = vmatpush1.msra.mxu0 0.0
        %629 = vmatprep.subr.mxu0 0.0
        %630 = vmatpush1.msra.mxu0 0.0
        %631 = vmatprep.subr.mxu0 0.0
        %632 = vmatpush1.msra.mxu0 0.0
        %633 = vmatprep.subr.mxu0 0.0
        %634 = vmatpush1.msra.mxu0 0.0
        %635 = vmatprep.subr.mxu0 0.0
        %636 = vmatpush1.msra.mxu0 0.0
        %637 = vmatprep.subr.mxu0 0.0
        %638 = vmatpush1.msra.mxu0 0.0
        %639 = vmatprep.subr.mxu0 0.0
        %640 = vmatpush1.msra.mxu0 0.0
        %641 = vmatprep.subr.mxu0 0.0
        %642 = vmatpush1.msra.mxu0 0.0
        %643 = vmatprep.subr.mxu0 0.0
        %644 = vmatpush1.msra.mxu0 0.0
        %645 = vmatprep.subr.mxu0 0.0
        %646 = vmatpush1.msra.mxu0 0.0
        %647 = vmatprep.subr.mxu0 0.0
        %648 = vmatpush1.msra.mxu0 0.0
        %649 = vmatprep.subr.mxu0 0.0
        %650 = vmatpush1.msra.mxu0 0.0
        %651 = vmatprep.subr.mxu0 0.0
        %652 = vmatpush1.msra.mxu0 0.0
        %653 = vmatprep.subr.mxu0 0.0
        %654 = vmatpush1.msra.mxu0 0.0
        %655 = vmatprep.subr.mxu0 0.0
        %656 = vmatpush1.msra.mxu0 0.0
        %657 = vmatprep.subr.mxu0 0.0
        %658 = vmatpush1.msra.mxu0 0.0
        %659 = vmatprep.subr.mxu0 0.0
        %660 = vmatpush1.msra.mxu0 0.0
        %661 = vmatprep.subr.mxu0 0.0
        %662 = vmatpush1.msra.mxu0 0.0
        %663 = vmatprep.subr.mxu0 0.0
        %664 = vmatpush1.msra.mxu0 0.0
        %665 = vmatprep.subr.mxu0 0.0
        %666 = vmatpush1.msra.mxu0 0.0
        %667 = vmatprep.subr.mxu0 0.0
        %668 = vmatpush1.msra.mxu0 0.0
        %669 = vmatprep.subr.mxu0 0.0
        %670 = vmatpush1.msra.mxu0 0.0
        %671 = vmatprep.subr.mxu0 0.0
        %672 = vmatpush1.msra.mxu0 0.0
        %673 = vmatprep.subr.mxu0 0.0
        %674 = vmatpush1.msra.mxu0 0.0
        %675 = vmatprep.mubr.f32.mxu0 0.0
        %676 = vmatmul.mubr.f32.gmra.mrb[0].mxu0 %v605
        %v677 = vpop.f32.mrb[0].mxu0
        %v678 = vadd.f32 0.0, %v677
        %v679 = vpop.f32.mrb[0].mxu0
        %v680 = vadd.f32 0.0, %v679
        %681 = vdwg.mxu0
        %v683 = vcombine.high %v587, %v587
        %v685 = vsel %vm341, %v588, 0
        %v687 = vsel %vm345, %v587, 0
        %v689 = vsel %vm345, %v683, 0
        %691 = vmatprep.subr.mxu0 %v689
        %692 = vmatpush1.msra.mxu0 %v687
        %693 = vmatprep.subr.mxu0 0.0
        %694 = vmatpush1.msra.mxu0 0.0
        %695 = vmatprep.subr.mxu0 0.0
        %696 = vmatpush1.msra.mxu0 0.0
        %697 = vmatprep.subr.mxu0 0.0
        %698 = vmatpush1.msra.mxu0 0.0
        %699 = vmatprep.subr.mxu0 0.0
        %700 = vmatpush1.msra.mxu0 0.0
        %701 = vmatprep.subr.mxu0 0.0
        %702 = vmatpush1.msra.mxu0 0.0
        %703 = vmatprep.subr.mxu0 0.0
        %704 = vmatpush1.msra.mxu0 0.0
        %705 = vmatprep.subr.mxu0 0.0
        %706 = vmatpush1.msra.mxu0 0.0
        %707 = vmatprep.subr.mxu0 0.0
        %708 = vmatpush1.msra.mxu0 0.0
        %709 = vmatprep.subr.mxu0 0.0
        %710 = vmatpush1.msra.mxu0 0.0
        %711 = vmatprep.subr.mxu0 0.0
        %712 = vmatpush1.msra.mxu0 0.0
        %713 = vmatprep.subr.mxu0 0.0
        %714 = vmatpush1.msra.mxu0 0.0
        %715 = vmatprep.subr.mxu0 0.0
        %716 = vmatpush1.msra.mxu0 0.0
        %717 = vmatprep.subr.mxu0 0.0
        %718 = vmatpush1.msra.mxu0 0.0
        %719 = vmatprep.subr.mxu0 0.0
        %720 = vmatpush1.msra.mxu0 0.0
        %721 = vmatprep.subr.mxu0 0.0
        %722 = vmatpush1.msra.mxu0 0.0
        %723 = vmatprep.subr.mxu0 0.0
        %724 = vmatpush1.msra.mxu0 0.0
        %725 = vmatprep.subr.mxu0 0.0
        %726 = vmatpush1.msra.mxu0 0.0
        %727 = vmatprep.subr.mxu0 0.0
        %728 = vmatpush1.msra.mxu0 0.0
        %729 = vmatprep.subr.mxu0 0.0
        %730 = vmatpush1.msra.mxu0 0.0
        %731 = vmatprep.subr.mxu0 0.0
        %732 = vmatpush1.msra.mxu0 0.0
        %733 = vmatprep.subr.mxu0 0.0
        %734 = vmatpush1.msra.mxu0 0.0
        %735 = vmatprep.subr.mxu0 0.0
        %736 = vmatpush1.msra.mxu0 0.0
        %737 = vmatprep.subr.mxu0 0.0
        %738 = vmatpush1.msra.mxu0 0.0
        %739 = vmatprep.subr.mxu0 0.0
        %740 = vmatpush1.msra.mxu0 0.0
        %741 = vmatprep.subr.mxu0 0.0
        %742 = vmatpush1.msra.mxu0 0.0
        %743 = vmatprep.subr.mxu0 0.0
        %744 = vmatpush1.msra.mxu0 0.0
        %745 = vmatprep.subr.mxu0 0.0
        %746 = vmatpush1.msra.mxu0 0.0
        %747 = vmatprep.subr.mxu0 0.0
        %748 = vmatpush1.msra.mxu0 0.0
        %749 = vmatprep.subr.mxu0 0.0
        %750 = vmatpush1.msra.mxu0 0.0
        %751 = vmatprep.subr.mxu0 0.0
        %752 = vmatpush1.msra.mxu0 0.0
        %753 = vmatprep.subr.mxu0 0.0
        %754 = vmatpush1.msra.mxu0 0.0
        %755 = vmatprep.mubr.f32.mxu0 0.0
        %756 = vmatmul.mubr.f32.gmra.mrb[0].mxu0 %v685
        %v757 = vpop.f32.mrb[0].mxu0
        %v758 = vadd.f32 %v678, %v757
        %v759 = vpop.f32.mrb[0].mxu0
        %v760 = vadd.f32 %v680, %v759
        %761 = vdwg.mxu0
        %v762 = vld [vmem:[#allocation2] sm:$0xff]
        %v763 = vld [vmem:[#allocation2 + $0x8] sm:$0xf]
        %v766 = vcombine.low %v580, %v581
        %767 = vrot.lane.b32.xlu0 %v766, 2
        %v768 = vpop.permute.xlu0 %767
        %v769 = vrot.slane %v768, 4
        %vm770 = vcmask 15360
        %v771 = vsel %vm770, %v769, %v768
        %v774 = vmul.f32 %v762, %v771
        %v775 = vmul.f32 %v763, %v769
        %s776 = scalar_lea.vmem %s3, 8
        %v777 = vld [vmem:[%s776] sm:$0xf]
        %v780 = vcombine.high %v774, %v774
        %781 = vrot.lane.b32.xlu0 %v774, 126
        %v782 = vpop.permute.xlu0 %781
        %783 = vrot.lane.b32.xlu0 %v780, 126
        %v784 = vpop.permute.xlu0 %783
        %785 = vrot.lane.b32.xlu0 %v775, 126
        %v786 = vpop.permute.xlu0 %785
        %vm787 = vcmask 1031168
        %v788 = vsel %vm787, %v782, %v784
        %v789 = vsel %vm787, %v784, %v786
        %v791 = vsel %vm341, %v777, 0
        %v793 = vsel %vm345, %v788, 0
        %v795 = vsel %vm345, %v789, 0
        %797 = vmatprep.subr.mxu0 %v795
        %798 = vmatpush1.msra.mxu0 %v793
        %799 = vmatprep.subr.mxu0 0.0
        %800 = vmatpush1.msra.mxu0 0.0
        %801 = vmatprep.subr.mxu0 0.0
        %802 = vmatpush1.msra.mxu0 0.0
        %803 = vmatprep.subr.mxu0 0.0
        %804 = vmatpush1.msra.mxu0 0.0
        %805 = vmatprep.subr.mxu0 0.0
        %806 = vmatpush1.msra.mxu0 0.0
        %807 = vmatprep.subr.mxu0 0.0
        %808 = vmatpush1.msra.mxu0 0.0
        %809 = vmatprep.subr.mxu0 0.0
        %810 = vmatpush1.msra.mxu0 0.0
        %811 = vmatprep.subr.mxu0 0.0
        %812 = vmatpush1.msra.mxu0 0.0
        %813 = vmatprep.subr.mxu0 0.0
        %814 = vmatpush1.msra.mxu0 0.0
        %815 = vmatprep.subr.mxu0 0.0
        %816 = vmatpush1.msra.mxu0 0.0
        %817 = vmatprep.subr.mxu0 0.0
        %818 = vmatpush1.msra.mxu0 0.0
        %819 = vmatprep.subr.mxu0 0.0
        %820 = vmatpush1.msra.mxu0 0.0
        %821 = vmatprep.subr.mxu0 0.0
        %822 = vmatpush1.msra.mxu0 0.0
        %823 = vmatprep.subr.mxu0 0.0
        %824 = vmatpush1.msra.mxu0 0.0
        %825 = vmatprep.subr.mxu0 0.0
        %826 = vmatpush1.msra.mxu0 0.0
        %827 = vmatprep.subr.mxu0 0.0
        %828 = vmatpush1.msra.mxu0 0.0
        %829 = vmatprep.subr.mxu0 0.0
        %830 = vmatpush1.msra.mxu0 0.0
        %831 = vmatprep.subr.mxu0 0.0
        %832 = vmatpush1.msra.mxu0 0.0
        %833 = vmatprep.subr.mxu0 0.0
        %834 = vmatpush1.msra.mxu0 0.0
        %835 = vmatprep.subr.mxu0 0.0
        %836 = vmatpush1.msra.mxu0 0.0
        %837 = vmatprep.subr.mxu0 0.0
        %838 = vmatpush1.msra.mxu0 0.0
        %839 = vmatprep.subr.mxu0 0.0
        %840 = vmatpush1.msra.mxu0 0.0
        %841 = vmatprep.subr.mxu0 0.0
        %842 = vmatpush1.msra.mxu0 0.0
        %843 = vmatprep.subr.mxu0 0.0
        %844 = vmatpush1.msra.mxu0 0.0
        %845 = vmatprep.subr.mxu0 0.0
        %846 = vmatpush1.msra.mxu0 0.0
        %847 = vmatprep.subr.mxu0 0.0
        %848 = vmatpush1.msra.mxu0 0.0
        %849 = vmatprep.subr.mxu0 0.0
        %850 = vmatpush1.msra.mxu0 0.0
        %851 = vmatprep.subr.mxu0 0.0
        %852 = vmatpush1.msra.mxu0 0.0
        %853 = vmatprep.subr.mxu0 0.0
        %854 = vmatpush1.msra.mxu0 0.0
        %855 = vmatprep.subr.mxu0 0.0
        %856 = vmatpush1.msra.mxu0 0.0
        %857 = vmatprep.subr.mxu0 0.0
        %858 = vmatpush1.msra.mxu0 0.0
        %859 = vmatprep.subr.mxu0 0.0
        %860 = vmatpush1.msra.mxu0 0.0
        %861 = vmatprep.mubr.f32.mxu0 0.0
        %862 = vmatmul.mubr.f32.gmra.mrb[0].mxu0 %v791
        %v863 = vpop.f32.mrb[0].mxu0
        %v864 = vadd.f32 0.0, %v863
        %v865 = vpop.f32.mrb[0].mxu0
        %v866 = vadd.f32 0.0, %v865
        %867 = vdwg.mxu0
        %v868 = vadd.f32 %v758, %v864
        %v869 = vadd.f32 %v760, %v866
        %v870 = vld [vmem:[#allocation2] sm:$0xff]
        %v871 = vld [vmem:[#allocation2 + $0x8] sm:$0xf]
        %872 = vrot.lane.b32.xlu0 %v585, 16
        %v873 = vpop.permute.xlu0 %872
        %v874 = vrot.slane %v873, 4
        %vm875 = vcmask 130048
        %v876 = vsel %vm875, %v874, %v873
        %v879 = vmul.f32 %v870, %v876
        %v880 = vmul.f32 %v871, %v874
        %s881 = scalar_lea.vmem %s3, 12
        %v882 = vld [vmem:[%s881] sm:$0xf]
        %v885 = vcombine.high %v879, %v879
        %886 = vrot.lane.b32.xlu0 %v879, 112
        %v887 = vpop.permute.xlu0 %886
        %888 = vrot.lane.b32.xlu0 %v885, 112
        %v889 = vpop.permute.xlu0 %888
        %890 = vrot.lane.b32.xlu0 %v880, 112
        %v891 = vpop.permute.xlu0 %890
        %vm892 = vcmask 916480
        %v893 = vsel %vm892, %v887, %v889
        %v894 = vsel %vm892, %v889, %v891
        %v896 = vsel %vm341, %v882, 0
        %v898 = vsel %vm345, %v893, 0
        %v900 = vsel %vm345, %v894, 0
        %902 = vmatprep.subr.mxu0 %v900
        %903 = vmatpush1.msra.mxu0 %v898
        %904 = vmatprep.subr.mxu0 0.0
        %905 = vmatpush1.msra.mxu0 0.0
        %906 = vmatprep.subr.mxu0 0.0
        %907 = vmatpush1.msra.mxu0 0.0
        %908 = vmatprep.subr.mxu0 0.0
        %909 = vmatpush1.msra.mxu0 0.0
        %910 = vmatprep.subr.mxu0 0.0
        %911 = vmatpush1.msra.mxu0 0.0
        %912 = vmatprep.subr.mxu0 0.0
        %913 = vmatpush1.msra.mxu0 0.0
        %914 = vmatprep.subr.mxu0 0.0
        %915 = vmatpush1.msra.mxu0 0.0
        %916 = vmatprep.subr.mxu0 0.0
        %917 = vmatpush1.msra.mxu0 0.0
        %918 = vmatprep.subr.mxu0 0.0
        %919 = vmatpush1.msra.mxu0 0.0
        %920 = vmatprep.subr.mxu0 0.0
        %921 = vmatpush1.msra.mxu0 0.0
        %922 = vmatprep.subr.mxu0 0.0
        %923 = vmatpush1.msra.mxu0 0.0
        %924 = vmatprep.subr.mxu0 0.0
        %925 = vmatpush1.msra.mxu0 0.0
        %926 = vmatprep.subr.mxu0 0.0
        %927 = vmatpush1.msra.mxu0 0.0
        %928 = vmatprep.subr.mxu0 0.0
        %929 = vmatpush1.msra.mxu0 0.0
        %930 = vmatprep.subr.mxu0 0.0
        %931 = vmatpush1.msra.mxu0 0.0
        %932 = vmatprep.subr.mxu0 0.0
        %933 = vmatpush1.msra.mxu0 0.0
        %934 = vmatprep.subr.mxu0 0.0
        %935 = vmatpush1.msra.mxu0 0.0
        %936 = vmatprep.subr.mxu0 0.0
        %937 = vmatpush1.msra.mxu0 0.0
        %938 = vmatprep.subr.mxu0 0.0
        %939 = vmatpush1.msra.mxu0 0.0
        %940 = vmatprep.subr.mxu0 0.0
        %941 = vmatpush1.msra.mxu0 0.0
        %942 = vmatprep.subr.mxu0 0.0
        %943 = vmatpush1.msra.mxu0 0.0
        %944 = vmatprep.subr.mxu0 0.0
        %945 = vmatpush1.msra.mxu0 0.0
        %946 = vmatprep.subr.mxu0 0.0
        %947 = vmatpush1.msra.mxu0 0.0
        %948 = vmatprep.subr.mxu0 0.0
        %949 = vmatpush1.msra.mxu0 0.0
        %950 = vmatprep.subr.mxu0 0.0
        %951 = vmatpush1.msra.mxu0 0.0
        %952 = vmatprep.subr.mxu0 0.0
        %953 = vmatpush1.msra.mxu0 0.0
        %954 = vmatprep.subr.mxu0 0.0
        %955 = vmatpush1.msra.mxu0 0.0
        %956 = vmatprep.subr.mxu0 0.0
        %957 = vmatpush1.msra.mxu0 0.0
        %958 = vmatprep.subr.mxu0 0.0
        %959 = vmatpush1.msra.mxu0 0.0
        %960 = vmatprep.subr.mxu0 0.0
        %961 = vmatpush1.msra.mxu0 0.0
        %962 = vmatprep.subr.mxu0 0.0
        %963 = vmatpush1.msra.mxu0 0.0
        %964 = vmatprep.subr.mxu0 0.0
        %965 = vmatpush1.msra.mxu0 0.0
        %966 = vmatprep.mubr.f32.mxu0 0.0
        %967 = vmatmul.mubr.f32.gmra.mrb[0].mxu0 %v896
        %v968 = vpop.f32.mrb[0].mxu0
        %v969 = vadd.f32 0.0, %v968
        %v970 = vpop.f32.mrb[0].mxu0
        %v971 = vadd.f32 0.0, %v970
        %972 = vdwg.mxu0
        %v973 = vadd.f32 %v868, %v969
        %v974 = vadd.f32 %v869, %v971
        %v975 = vld [vmem:[#allocation2] sm:$0xff]
        %v976 = vld [vmem:[#allocation2 + $0x8] sm:$0xf]
        %s977 = scalar_lea.vmem %s3, 16
        %v978 = vld [vmem:[%s977] sm:$0xf]
        %v981 = vcombine.high %v975, %v975
        %982 = vrot.lane.b32.xlu0 %v975, 111
        %v983 = vpop.permute.xlu0 %982
        %984 = vrot.lane.b32.xlu0 %v981, 111
        %v985 = vpop.permute.xlu0 %984
        %986 = vrot.lane.b32.xlu0 %v976, 111
        %v987 = vpop.permute.xlu0 %986
        %vm988 = vcmask 908288
        %v989 = vsel %vm988, %v983, %v985
        %v990 = vsel %vm988, %v985, %v987
        %v992 = vsel %vm341, %v978, 0
        %v994 = vsel %vm345, %v989, 0
        %v996 = vsel %vm345, %v990, 0
        %998 = vmatprep.subr.mxu0 %v996
        %999 = vmatpush1.msra.mxu0 %v994
        %1000 = vmatprep.subr.mxu0 0.0
        %1001 = vmatpush1.msra.mxu0 0.0
        %1002 = vmatprep.subr.mxu0 0.0
        %1003 = vmatpush1.msra.mxu0 0.0
        %1004 = vmatprep.subr.mxu0 0.0
        %1005 = vmatpush1.msra.mxu0 0.0
        %1006 = vmatprep.subr.mxu0 0.0
        %1007 = vmatpush1.msra.mxu0 0.0
        %1008 = vmatprep.subr.mxu0 0.0
        %1009 = vmatpush1.msra.mxu0 0.0
        %1010 = vmatprep.subr.mxu0 0.0
        %1011 = vmatpush1.msra.mxu0 0.0
        %1012 = vmatprep.subr.mxu0 0.0
        %1013 = vmatpush1.msra.mxu0 0.0
        %1014 = vmatprep.subr.mxu0 0.0
        %1015 = vmatpush1.msra.mxu0 0.0
        %1016 = vmatprep.subr.mxu0 0.0
        %1017 = vmatpush1.msra.mxu0 0.0
        %1018 = vmatprep.subr.mxu0 0.0
        %1019 = vmatpush1.msra.mxu0 0.0
        %1020 = vmatprep.subr.mxu0 0.0
        %1021 = vmatpush1.msra.mxu0 0.0
        %1022 = vmatprep.subr.mxu0 0.0
        %1023 = vmatpush1.msra.mxu0 0.0
        %1024 = vmatprep.subr.mxu0 0.0
        %1025 = vmatpush1.msra.mxu0 0.0
        %1026 = vmatprep.subr.mxu0 0.0
        %1027 = vmatpush1.msra.mxu0 0.0
        %1028 = vmatprep.subr.mxu0 0.0
        %1029 = vmatpush1.msra.mxu0 0.0
        %1030 = vmatprep.subr.mxu0 0.0
        %1031 = vmatpush1.msra.mxu0 0.0
        %1032 = vmatprep.subr.mxu0 0.0
        %1033 = vmatpush1.msra.mxu0 0.0
        %1034 = vmatprep.subr.mxu0 0.0
        %1035 = vmatpush1.msra.mxu0 0.0
        %1036 = vmatprep.subr.mxu0 0.0
        %1037 = vmatpush1.msra.mxu0 0.0
        %1038 = vmatprep.subr.mxu0 0.0
        %1039 = vmatpush1.msra.mxu0 0.0
        %1040 = vmatprep.subr.mxu0 0.0
        %1041 = vmatpush1.msra.mxu0 0.0
        %1042 = vmatprep.subr.mxu0 0.0
        %1043 = vmatpush1.msra.mxu0 0.0
        %1044 = vmatprep.subr.mxu0 0.0
        %1045 = vmatpush1.msra.mxu0 0.0
        %1046 = vmatprep.subr.mxu0 0.0
        %1047 = vmatpush1.msra.mxu0 0.0
        %1048 = vmatprep.subr.mxu0 0.0
        %1049 = vmatpush1.msra.mxu0 0.0
        %1050 = vmatprep.subr.mxu0 0.0
        %1051 = vmatpush1.msra.mxu0 0.0
        %1052 = vmatprep.subr.mxu0 0.0
        %1053 = vmatpush1.msra.mxu0 0.0
        %1054 = vmatprep.subr.mxu0 0.0
        %1055 = vmatpush1.msra.mxu0 0.0
        %1056 = vmatprep.subr.mxu0 0.0
        %1057 = vmatpush1.msra.mxu0 0.0
        %1058 = vmatprep.subr.mxu0 0.0
        %1059 = vmatpush1.msra.mxu0 0.0
        %1060 = vmatprep.subr.mxu0 0.0
        %1061 = vmatpush1.msra.mxu0 0.0
        %1062 = vmatprep.mubr.f32.mxu0 0.0
        %1063 = vmatmul.mubr.f32.gmra.mrb[0].mxu0 %v992
        %v1064 = vpop.f32.mrb[0].mxu0
        %v1065 = vadd.f32 0.0, %v1064
        %v1066 = vpop.f32.mrb[0].mxu0
        %v1067 = vadd.f32 0.0, %v1066
        %1068 = vdwg.mxu0
        %v1069 = vadd.f32 %v973, %v1065
        %v1070 = vadd.f32 %v974, %v1067
        %v1071 = vld [vmem:[#allocation2] sm:$0xff]
        %v1072 = vld [vmem:[#allocation2 + $0x8] sm:$0xf]
        %1073 = vrot.lane.b32.xlu0 %v766, 18
        %v1074 = vpop.permute.xlu0 %1073
        %v1075 = vrot.slane %v1074, 4
        %vm1076 = vcmask 146432
        %v1077 = vsel %vm1076, %v1075, %v1074
        %v1080 = vmul.f32 %v1071, %v1077
        %v1081 = vmul.f32 %v1072, %v1075
        %s1082 = scalar_lea.vmem %s3, 20
        %v1083 = vld [vmem:[%s1082] sm:$0xf]
        %v1086 = vcombine.high %v1080, %v1080
        %1087 = vrot.lane.b32.xlu0 %v1080, 110
        %v1088 = vpop.permute.xlu0 %1087
        %1089 = vrot.lane.b32.xlu0 %v1086, 110
        %v1090 = vpop.permute.xlu0 %1089
        %1091 = vrot.lane.b32.xlu0 %v1081, 110
        %v1092 = vpop.permute.xlu0 %1091
        %vm1093 = vcmask 900096
        %v1094 = vsel %vm1093, %v1088, %v1090
        %v1095 = vsel %vm1093, %v1090, %v1092
        %v1097 = vsel %vm341, %v1083, 0
        %v1099 = vsel %vm345, %v1094, 0
        %v1101 = vsel %vm345, %v1095, 0
        %1103 = vmatprep.subr.mxu0 %v1101
        %1104 = vmatpush1.msra.mxu0 %v1099
        %1105 = vmatprep.subr.mxu0 0.0
        %1106 = vmatpush1.msra.mxu0 0.0
        %1107 = vmatprep.subr.mxu0 0.0
        %1108 = vmatpush1.msra.mxu0 0.0
        %1109 = vmatprep.subr.mxu0 0.0
        %1110 = vmatpush1.msra.mxu0 0.0
        %1111 = vmatprep.subr.mxu0 0.0
        %1112 = vmatpush1.msra.mxu0 0.0
        %1113 = vmatprep.subr.mxu0 0.0
        %1114 = vmatpush1.msra.mxu0 0.0
        %1115 = vmatprep.subr.mxu0 0.0
        %1116 = vmatpush1.msra.mxu0 0.0
        %1117 = vmatprep.subr.mxu0 0.0
        %1118 = vmatpush1.msra.mxu0 0.0
        %1119 = vmatprep.subr.mxu0 0.0
        %1120 = vmatpush1.msra.mxu0 0.0
        %1121 = vmatprep.subr.mxu0 0.0
        %1122 = vmatpush1.msra.mxu0 0.0
        %1123 = vmatprep.subr.mxu0 0.0
        %1124 = vmatpush1.msra.mxu0 0.0
        %1125 = vmatprep.subr.mxu0 0.0
        %1126 = vmatpush1.msra.mxu0 0.0
        %1127 = vmatprep.subr.mxu0 0.0
        %1128 = vmatpush1.msra.mxu0 0.0
        %1129 = vmatprep.subr.mxu0 0.0
        %1130 = vmatpush1.msra.mxu0 0.0
        %1131 = vmatprep.subr.mxu0 0.0
        %1132 = vmatpush1.msra.mxu0 0.0
        %1133 = vmatprep.subr.mxu0 0.0
        %1134 = vmatpush1.msra.mxu0 0.0
        %1135 = vmatprep.subr.mxu0 0.0
        %1136 = vmatpush1.msra.mxu0 0.0
        %1137 = vmatprep.subr.mxu0 0.0
        %1138 = vmatpush1.msra.mxu0 0.0
        %1139 = vmatprep.subr.mxu0 0.0
        %1140 = vmatpush1.msra.mxu0 0.0
        %1141 = vmatprep.subr.mxu0 0.0
        %1142 = vmatpush1.msra.mxu0 0.0
        %1143 = vmatprep.subr.mxu0 0.0
        %1144 = vmatpush1.msra.mxu0 0.0
        %1145 = vmatprep.subr.mxu0 0.0
        %1146 = vmatpush1.msra.mxu0 0.0
        %1147 = vmatprep.subr.mxu0 0.0
        %1148 = vmatpush1.msra.mxu0 0.0
        %1149 = vmatprep.subr.mxu0 0.0
        %1150 = vmatpush1.msra.mxu0 0.0
        %1151 = vmatprep.subr.mxu0 0.0
        %1152 = vmatpush1.msra.mxu0 0.0
        %1153 = vmatprep.subr.mxu0 0.0
        %1154 = vmatpush1.msra.mxu0 0.0
        %1155 = vmatprep.subr.mxu0 0.0
        %1156 = vmatpush1.msra.mxu0 0.0
        %1157 = vmatprep.subr.mxu0 0.0
        %1158 = vmatpush1.msra.mxu0 0.0
        %1159 = vmatprep.subr.mxu0 0.0
        %1160 = vmatpush1.msra.mxu0 0.0
        %1161 = vmatprep.subr.mxu0 0.0
        %1162 = vmatpush1.msra.mxu0 0.0
        %1163 = vmatprep.subr.mxu0 0.0
        %1164 = vmatpush1.msra.mxu0 0.0
        %1165 = vmatprep.subr.mxu0 0.0
        %1166 = vmatpush1.msra.mxu0 0.0
        %1167 = vmatprep.mubr.f32.mxu0 0.0
        %1168 = vmatmul.mubr.f32.gmra.mrb[0].mxu0 %v1097
        %v1169 = vpop.f32.mrb[0].mxu0
        %v1170 = vadd.f32 0.0, %v1169
        %v1171 = vpop.f32.mrb[0].mxu0
        %v1172 = vadd.f32 0.0, %v1171
        %1173 = vdwg.mxu0
        %v1174 = vadd.f32 %v1069, %v1170
        %v1175 = vadd.f32 %v1070, %v1172
        %v1176 = vld [vmem:[#allocation2] sm:$0xff]
        %v1177 = vld [vmem:[#allocation2 + $0x8] sm:$0xf]
        %1178 = vrot.lane.b32.xlu0 %v585, 32
        %v1179 = vpop.permute.xlu0 %1178
        %v1180 = vrot.slane %v1179, 4
        %vm1181 = vcmask 261120
        %v1182 = vsel %vm1181, %v1180, %v1179
        %v1185 = vmul.f32 %v1176, %v1182
        %v1186 = vmul.f32 %v1177, %v1180
        %s1187 = scalar_lea.vmem %s3, 24
        %v1188 = vld [vmem:[%s1187] sm:$0xf]
        %v1191 = vcombine.high %v1185, %v1185
        %1192 = vrot.lane.b32.xlu0 %v1185, 96
        %v1193 = vpop.permute.xlu0 %1192
        %1194 = vrot.lane.b32.xlu0 %v1191, 96
        %v1195 = vpop.permute.xlu0 %1194
        %1196 = vrot.lane.b32.xlu0 %v1186, 96
        %v1197 = vpop.permute.xlu0 %1196
        %vm1198 = vcmask 785408
        %v1199 = vsel %vm1198, %v1193, %v1195
        %v1200 = vsel %vm1198, %v1195, %v1197
        %v1202 = vsel %vm341, %v1188, 0
        %v1204 = vsel %vm345, %v1199, 0
        %v1206 = vsel %vm345, %v1200, 0
        %1208 = vmatprep.subr.mxu0 %v1206
        %1209 = vmatpush1.msra.mxu0 %v1204
        %1210 = vmatprep.subr.mxu0 0.0
        %1211 = vmatpush1.msra.mxu0 0.0
        %1212 = vmatprep.subr.mxu0 0.0
        %1213 = vmatpush1.msra.mxu0 0.0
        %1214 = vmatprep.subr.mxu0 0.0
        %1215 = vmatpush1.msra.mxu0 0.0
        %1216 = vmatprep.subr.mxu0 0.0
        %1217 = vmatpush1.msra.mxu0 0.0
        %1218 = vmatprep.subr.mxu0 0.0
        %1219 = vmatpush1.msra.mxu0 0.0
        %1220 = vmatprep.subr.mxu0 0.0
        %1221 = vmatpush1.msra.mxu0 0.0
        %1222 = vmatprep.subr.mxu0 0.0
        %1223 = vmatpush1.msra.mxu0 0.0
        %1224 = vmatprep.subr.mxu0 0.0
        %1225 = vmatpush1.msra.mxu0 0.0
        %1226 = vmatprep.subr.mxu0 0.0
        %1227 = vmatpush1.msra.mxu0 0.0
        %1228 = vmatprep.subr.mxu0 0.0
        %1229 = vmatpush1.msra.mxu0 0.0
        %1230 = vmatprep.subr.mxu0 0.0
        %1231 = vmatpush1.msra.mxu0 0.0
        %1232 = vmatprep.subr.mxu0 0.0
        %1233 = vmatpush1.msra.mxu0 0.0
        %1234 = vmatprep.subr.mxu0 0.0
        %1235 = vmatpush1.msra.mxu0 0.0
        %1236 = vmatprep.subr.mxu0 0.0
        %1237 = vmatpush1.msra.mxu0 0.0
        %1238 = vmatprep.subr.mxu0 0.0
        %1239 = vmatpush1.msra.mxu0 0.0
        %1240 = vmatprep.subr.mxu0 0.0
        %1241 = vmatpush1.msra.mxu0 0.0
        %1242 = vmatprep.subr.mxu0 0.0
        %1243 = vmatpush1.msra.mxu0 0.0
        %1244 = vmatprep.subr.mxu0 0.0
        %1245 = vmatpush1.msra.mxu0 0.0
        %1246 = vmatprep.subr.mxu0 0.0
        %1247 = vmatpush1.msra.mxu0 0.0
        %1248 = vmatprep.subr.mxu0 0.0
        %1249 = vmatpush1.msra.mxu0 0.0
        %1250 = vmatprep.subr.mxu0 0.0
        %1251 = vmatpush1.msra.mxu0 0.0
        %1252 = vmatprep.subr.mxu0 0.0
        %1253 = vmatpush1.msra.mxu0 0.0
        %1254 = vmatprep.subr.mxu0 0.0
        %1255 = vmatpush1.msra.mxu0 0.0
        %1256 = vmatprep.subr.mxu0 0.0
        %1257 = vmatpush1.msra.mxu0 0.0
        %1258 = vmatprep.subr.mxu0 0.0
        %1259 = vmatpush1.msra.mxu0 0.0
        %1260 = vmatprep.subr.mxu0 0.0
        %1261 = vmatpush1.msra.mxu0 0.0
        %1262 = vmatprep.subr.mxu0 0.0
        %1263 = vmatpush1.msra.mxu0 0.0
        %1264 = vmatprep.subr.mxu0 0.0
        %1265 = vmatpush1.msra.mxu0 0.0
        %1266 = vmatprep.subr.mxu0 0.0
        %1267 = vmatpush1.msra.mxu0 0.0
        %1268 = vmatprep.subr.mxu0 0.0
        %1269 = vmatpush1.msra.mxu0 0.0
        %1270 = vmatprep.subr.mxu0 0.0
        %1271 = vmatpush1.msra.mxu0 0.0
        %1272 = vmatprep.mubr.f32.mxu0 0.0
        %1273 = vmatmul.mubr.f32.gmra.mrb[0].mxu0 %v1202
        %v1274 = vpop.f32.mrb[0].mxu0
        %v1275 = vadd.f32 0.0, %v1274
        %v1276 = vpop.f32.mrb[0].mxu0
        %v1277 = vadd.f32 0.0, %v1276
        %1278 = vdwg.mxu0
        %v1279 = vadd.f32 %v1174, %v1275
        %v1280 = vadd.f32 %v1175, %v1277
        %v1281 = vld [vmem:[#allocation2] sm:$0xff]
        %v1282 = vld [vmem:[#allocation2 + $0x8] sm:$0xf]
        %s1283 = scalar_lea.vmem %s3, 28
        %v1284 = vld [vmem:[%s1283] sm:$0xf]
        %v1287 = vcombine.high %v1281, %v1281
        %1288 = vrot.lane.b32.xlu0 %v1281, 95
        %v1289 = vpop.permute.xlu0 %1288
        %1290 = vrot.lane.b32.xlu0 %v1287, 95
        %v1291 = vpop.permute.xlu0 %1290
        %1292 = vrot.lane.b32.xlu0 %v1282, 95
        %v1293 = vpop.permute.xlu0 %1292
        %vm1294 = vcmask 777216
        %v1295 = vsel %vm1294, %v1289, %v1291
        %v1296 = vsel %vm1294, %v1291, %v1293
        %v1298 = vsel %vm341, %v1284, 0
        %v1300 = vsel %vm345, %v1295, 0
        %v1302 = vsel %vm345, %v1296, 0
        %1304 = vmatprep.subr.mxu0 %v1302
        %1305 = vmatpush1.msra.mxu0 %v1300
        %1306 = vmatprep.subr.mxu0 0.0
        %1307 = vmatpush1.msra.mxu0 0.0
        %1308 = vmatprep.subr.mxu0 0.0
        %1309 = vmatpush1.msra.mxu0 0.0
        %1310 = vmatprep.subr.mxu0 0.0
        %1311 = vmatpush1.msra.mxu0 0.0
        %1312 = vmatprep.subr.mxu0 0.0
        %1313 = vmatpush1.msra.mxu0 0.0
        %1314 = vmatprep.subr.mxu0 0.0
        %1315 = vmatpush1.msra.mxu0 0.0
        %1316 = vmatprep.subr.mxu0 0.0
        %1317 = vmatpush1.msra.mxu0 0.0
        %1318 = vmatprep.subr.mxu0 0.0
        %1319 = vmatpush1.msra.mxu0 0.0
        %1320 = vmatprep.subr.mxu0 0.0
        %1321 = vmatpush1.msra.mxu0 0.0
        %1322 = vmatprep.subr.mxu0 0.0
        %1323 = vmatpush1.msra.mxu0 0.0
        %1324 = vmatprep.subr.mxu0 0.0
        %1325 = vmatpush1.msra.mxu0 0.0
        %1326 = vmatprep.subr.mxu0 0.0
        %1327 = vmatpush1.msra.mxu0 0.0
        %1328 = vmatprep.subr.mxu0 0.0
        %1329 = vmatpush1.msra.mxu0 0.0
        %1330 = vmatprep.subr.mxu0 0.0
        %1331 = vmatpush1.msra.mxu0 0.0
        %1332 = vmatprep.subr.mxu0 0.0
        %1333 = vmatpush1.msra.mxu0 0.0
        %1334 = vmatprep.subr.mxu0 0.0
        %1335 = vmatpush1.msra.mxu0 0.0
        %1336 = vmatprep.subr.mxu0 0.0
        %1337 = vmatpush1.msra.mxu0 0.0
        %1338 = vmatprep.subr.mxu0 0.0
        %1339 = vmatpush1.msra.mxu0 0.0
        %1340 = vmatprep.subr.mxu0 0.0
        %1341 = vmatpush1.msra.mxu0 0.0
        %1342 = vmatprep.subr.mxu0 0.0
        %1343 = vmatpush1.msra.mxu0 0.0
        %1344 = vmatprep.subr.mxu0 0.0
        %1345 = vmatpush1.msra.mxu0 0.0
        %1346 = vmatprep.subr.mxu0 0.0
        %1347 = vmatpush1.msra.mxu0 0.0
        %1348 = vmatprep.subr.mxu0 0.0
        %1349 = vmatpush1.msra.mxu0 0.0
        %1350 = vmatprep.subr.mxu0 0.0
        %1351 = vmatpush1.msra.mxu0 0.0
        %1352 = vmatprep.subr.mxu0 0.0
        %1353 = vmatpush1.msra.mxu0 0.0
        %1354 = vmatprep.subr.mxu0 0.0
        %1355 = vmatpush1.msra.mxu0 0.0
        %1356 = vmatprep.subr.mxu0 0.0
        %1357 = vmatpush1.msra.mxu0 0.0
        %1358 = vmatprep.subr.mxu0 0.0
        %1359 = vmatpush1.msra.mxu0 0.0
        %1360 = vmatprep.subr.mxu0 0.0
        %1361 = vmatpush1.msra.mxu0 0.0
        %1362 = vmatprep.subr.mxu0 0.0
        %1363 = vmatpush1.msra.mxu0 0.0
        %1364 = vmatprep.subr.mxu0 0.0
        %1365 = vmatpush1.msra.mxu0 0.0
        %1366 = vmatprep.subr.mxu0 0.0
        %1367 = vmatpush1.msra.mxu0 0.0
        %1368 = vmatprep.mubr.f32.mxu0 0.0
        %1369 = vmatmul.mubr.f32.gmra.mrb[0].mxu0 %v1298
        %v1370 = vpop.f32.mrb[0].mxu0
        %v1371 = vadd.f32 0.0, %v1370
        %v1372 = vpop.f32.mrb[0].mxu0
        %v1373 = vadd.f32 0.0, %v1372
        %1374 = vdwg.mxu0
        %v1375 = vadd.f32 %v1279, %v1371
        %v1376 = vadd.f32 %v1280, %v1373
        %v1377 = vld [vmem:[#allocation2] sm:$0xff]
        %v1378 = vld [vmem:[#allocation2 + $0x8] sm:$0xf]
        %1379 = vrot.lane.b32.xlu0 %v766, 34
        %v1380 = vpop.permute.xlu0 %1379
        %v1381 = vrot.slane %v1380, 4
        %vm1382 = vcmask 277504
        %v1383 = vsel %vm1382, %v1381, %v1380
        %v1386 = vmul.f32 %v1377, %v1383
        %v1387 = vmul.f32 %v1378, %v1381
        %s1388 = scalar_lea.vmem %s3, 32
        %v1389 = vld [vmem:[%s1388] sm:$0xf]
        %v1392 = vcombine.high %v1386, %v1386
        %1393 = vrot.lane.b32.xlu0 %v1386, 94
        %v1394 = vpop.permute.xlu0 %1393
        %1395 = vrot.lane.b32.xlu0 %v1392, 94
        %v1396 = vpop.permute.xlu0 %1395
        %1397 = vrot.lane.b32.xlu0 %v1387, 94
        %v1398 = vpop.permute.xlu0 %1397
        %vm1399 = vcmask 769024
        %v1400 = vsel %vm1399, %v1394, %v1396
        %v1401 = vsel %vm1399, %v1396, %v1398
        %v1403 = vsel %vm341, %v1389, 0
        %v1405 = vsel %vm345, %v1400, 0
        %v1407 = vsel %vm345, %v1401, 0
        %1409 = vmatprep.subr.mxu0 %v1407
        %1410 = vmatpush1.msra.mxu0 %v1405
        %1411 = vmatprep.subr.mxu0 0.0
        %1412 = vmatpush1.msra.mxu0 0.0
        %1413 = vmatprep.subr.mxu0 0.0
        %1414 = vmatpush1.msra.mxu0 0.0
        %1415 = vmatprep.subr.mxu0 0.0
        %1416 = vmatpush1.msra.mxu0 0.0
        %1417 = vmatprep.subr.mxu0 0.0
        %1418 = vmatpush1.msra.mxu0 0.0
        %1419 = vmatprep.subr.mxu0 0.0
        %1420 = vmatpush1.msra.mxu0 0.0
        %1421 = vmatprep.subr.mxu0 0.0
        %1422 = vmatpush1.msra.mxu0 0.0
        %1423 = vmatprep.subr.mxu0 0.0
        %1424 = vmatpush1.msra.mxu0 0.0
        %1425 = vmatprep.subr.mxu0 0.0
        %1426 = vmatpush1.msra.mxu0 0.0
        %1427 = vmatprep.subr.mxu0 0.0
        %1428 = vmatpush1.msra.mxu0 0.0
        %1429 = vmatprep.subr.mxu0 0.0
        %1430 = vmatpush1.msra.mxu0 0.0
        %1431 = vmatprep.subr.mxu0 0.0
        %1432 = vmatpush1.msra.mxu0 0.0
        %1433 = vmatprep.subr.mxu0 0.0
        %1434 = vmatpush1.msra.mxu0 0.0
        %1435 = vmatprep.subr.mxu0 0.0
        %1436 = vmatpush1.msra.mxu0 0.0
        %1437 = vmatprep.subr.mxu0 0.0
        %1438 = vmatpush1.msra.mxu0 0.0
        %1439 = vmatprep.subr.mxu0 0.0
        %1440 = vmatpush1.msra.mxu0 0.0
        %1441 = vmatprep.subr.mxu0 0.0
        %1442 = vmatpush1.msra.mxu0 0.0
        %1443 = vmatprep.subr.mxu0 0.0
        %1444 = vmatpush1.msra.mxu0 0.0
        %1445 = vmatprep.subr.mxu0 0.0
        %1446 = vmatpush1.msra.mxu0 0.0
        %1447 = vmatprep.subr.mxu0 0.0
        %1448 = vmatpush1.msra.mxu0 0.0
        %1449 = vmatprep.subr.mxu0 0.0
        %1450 = vmatpush1.msra.mxu0 0.0
        %1451 = vmatprep.subr.mxu0 0.0
        %1452 = vmatpush1.msra.mxu0 0.0
        %1453 = vmatprep.subr.mxu0 0.0
        %1454 = vmatpush1.msra.mxu0 0.0
        %1455 = vmatprep.subr.mxu0 0.0
        %1456 = vmatpush1.msra.mxu0 0.0
        %1457 = vmatprep.subr.mxu0 0.0
        %1458 = vmatpush1.msra.mxu0 0.0
        %1459 = vmatprep.subr.mxu0 0.0
        %1460 = vmatpush1.msra.mxu0 0.0
        %1461 = vmatprep.subr.mxu0 0.0
        %1462 = vmatpush1.msra.mxu0 0.0
        %1463 = vmatprep.subr.mxu0 0.0
        %1464 = vmatpush1.msra.mxu0 0.0
        %1465 = vmatprep.subr.mxu0 0.0
        %1466 = vmatpush1.msra.mxu0 0.0
        %1467 = vmatprep.subr.mxu0 0.0
        %1468 = vmatpush1.msra.mxu0 0.0
        %1469 = vmatprep.subr.mxu0 0.0
        %1470 = vmatpush1.msra.mxu0 0.0
        %1471 = vmatprep.subr.mxu0 0.0
        %1472 = vmatpush1.msra.mxu0 0.0
        %1473 = vmatprep.mubr.f32.mxu0 0.0
        %1474 = vmatmul.mubr.f32.gmra.mrb[0].mxu0 %v1403
        %v1475 = vpop.f32.mrb[0].mxu0
        %v1476 = vadd.f32 0.0, %v1475
        %v1477 = vpop.f32.mrb[0].mxu0
        %v1478 = vadd.f32 0.0, %v1477
        %1479 = vdwg.mxu0
        %v1480 = vadd.f32 %v1375, %v1476
        %v1481 = vadd.f32 %v1376, %v1478
        %v1482 = vld [vmem:[%s4] sm:$0xf]
        %1484 = vset.pattern.permute.xlu0 0
        %1485 = vperm.xlu0 %1484, %v1482
        %v1486 = vpop.permute.xlu0 %1485
        %v1488 = vadd.f32 %v1480, %v1486
        %v1489 = vadd.f32 %v1481, %v1486
        %v1490 = vmin.f32 %v1488, 20.0
        %v1491 = vmin.f32 %v1489, 20.0
        %v1492 = vmul.f32 %v1490, 1.442695
        %v1493 = vpow.pop %v1492
        %v1494 = vmul.f32 %v1491, 1.442695
        %v1495 = vpow.pop %v1494
        %v1496 = vadd.f32 %v1493, 2.0
        %v1497 = vadd.f32 %v1495, 2.0
        %v1498 = vmul.f32 %v1493, %v1496
        %v1499 = vmul.f32 %v1495, %v1497
        %v1500 = vadd.f32 %v1498, 2.0
        %v1501 = vadd.f32 %v1499, 2.0
        %v1502 = vrcp.pop %v1500
        %v1503 = vrcp.pop %v1501
        %v1504 = vmul.f32 %v1498, %v1502
        %v1505 = vmul.f32 %v1499, %v1503
        %vm1506 = vcmp.gt.f32.partialorder %v1488, 20.0
        %vm1507 = vcmp.gt.f32.partialorder %v1489, 20.0
        %v1508 = vsel %vm1506, 1.0, %v1504
        %v1509 = vsel %vm1507, 1.0, %v1505
        %v1510 = vmul.f32 %v1488, %v1508
        %v1511 = vmul.f32 %v1489, %v1509
        %v1512 = vld [vmem:[%s5] sm:$0xff]
        %v1513 = vld [vmem:[%s6] sm:$0xff]
        %1515 = vset.pattern.permute.xlu0 0
        %1516 = vperm.xlu0 %1515, %v1513
        %v1517 = vpop.permute.xlu0 %1516
        %v1520 = vsel %vm341, %v1512, 0
        %v1523 = vsel %vm345, %v1510, 0
        %v1526 = vsel %vm345, %v1511, 0
        %1528 = vmatprep.subr.mxu0 %v1526
        %1529 = vmatpush1.msra.mxu0 %v1523
        %1530 = vmatprep.subr.mxu0 0.0
        %1531 = vmatpush1.msra.mxu0 0.0
        %1532 = vmatprep.subr.mxu0 0.0
        %1533 = vmatpush1.msra.mxu0 0.0
        %1534 = vmatprep.subr.mxu0 0.0
        %1535 = vmatpush1.msra.mxu0 0.0
        %1536 = vmatprep.subr.mxu0 0.0
        %1537 = vmatpush1.msra.mxu0 0.0
        %1538 = vmatprep.subr.mxu0 0.0
        %1539 = vmatpush1.msra.mxu0 0.0
        %1540 = vmatprep.subr.mxu0 0.0
        %1541 = vmatpush1.msra.mxu0 0.0
        %1542 = vmatprep.subr.mxu0 0.0
        %1543 = vmatpush1.msra.mxu0 0.0
        %1544 = vmatprep.subr.mxu0 0.0
        %1545 = vmatpush1.msra.mxu0 0.0
        %1546 = vmatprep.subr.mxu0 0.0
        %1547 = vmatpush1.msra.mxu0 0.0
        %1548 = vmatprep.subr.mxu0 0.0
        %1549 = vmatpush1.msra.mxu0 0.0
        %1550 = vmatprep.subr.mxu0 0.0
        %1551 = vmatpush1.msra.mxu0 0.0
        %1552 = vmatprep.subr.mxu0 0.0
        %1553 = vmatpush1.msra.mxu0 0.0
        %1554 = vmatprep.subr.mxu0 0.0
        %1555 = vmatpush1.msra.mxu0 0.0
        %1556 = vmatprep.subr.mxu0 0.0
        %1557 = vmatpush1.msra.mxu0 0.0
        %1558 = vmatprep.subr.mxu0 0.0
        %1559 = vmatpush1.msra.mxu0 0.0
        %1560 = vmatprep.subr.mxu0 0.0
        %1561 = vmatpush1.msra.mxu0 0.0
        %1562 = vmatprep.subr.mxu0 0.0
        %1563 = vmatpush1.msra.mxu0 0.0
        %1564 = vmatprep.subr.mxu0 0.0
        %1565 = vmatpush1.msra.mxu0 0.0
        %1566 = vmatprep.subr.mxu0 0.0
        %1567 = vmatpush1.msra.mxu0 0.0
        %1568 = vmatprep.subr.mxu0 0.0
        %1569 = vmatpush1.msra.mxu0 0.0
        %1570 = vmatprep.subr.mxu0 0.0
        %1571 = vmatpush1.msra.mxu0 0.0
        %1572 = vmatprep.subr.mxu0 0.0
        %1573 = vmatpush1.msra.mxu0 0.0
        %1574 = vmatprep.subr.mxu0 0.0
        %1575 = vmatpush1.msra.mxu0 0.0
        %1576 = vmatprep.subr.mxu0 0.0
        %1577 = vmatpush1.msra.mxu0 0.0
        %1578 = vmatprep.subr.mxu0 0.0
        %1579 = vmatpush1.msra.mxu0 0.0
        %1580 = vmatprep.subr.mxu0 0.0
        %1581 = vmatpush1.msra.mxu0 0.0
        %1582 = vmatprep.subr.mxu0 0.0
        %1583 = vmatpush1.msra.mxu0 0.0
        %1584 = vmatprep.subr.mxu0 0.0
        %1585 = vmatpush1.msra.mxu0 0.0
        %1586 = vmatprep.subr.mxu0 0.0
        %1587 = vmatpush1.msra.mxu0 0.0
        %1588 = vmatprep.subr.mxu0 0.0
        %1589 = vmatpush1.msra.mxu0 0.0
        %1590 = vmatprep.subr.mxu0 0.0
        %1591 = vmatpush1.msra.mxu0 0.0
        %1592 = vmatprep.mubr.f32.mxu0 0.0
        %1593 = vmatmul.mubr.f32.gmra.mrb[0].mxu0 %v1520
        %v1594 = vpop.f32.mrb[0].mxu0
        %v1595 = vadd.f32 %v1517, %v1594
        %v1596 = vpop.f32.mrb[0].mxu0
        %v1597 = vadd.f32 %v1517, %v1596
        %1598 = vdwg.mxu0
        %v1599 = vadd.f32 %v1595, %v417
        %v1600 = vadd.f32 %v1597, %v419
        %v1601 = vadd.f32 %v1599, %v1600
        %1602 = vadd.xlane.f32.xlu0 %v1601
        %v1603 = vpop.xlane.xlu0 %1602
        %v1604 = vrcp.pop 256.0
        %v1605 = vmul.f32 %v1603, %v1604
        %v1606 = vsub.f32 %v1599, %v1605
        %v1607 = vsub.f32 %v1600, %v1605
        %v1608 = vmul.f32 %v1606, %v1606
        %v1609 = vmul.f32 %v1607, %v1607
        %v1610 = vadd.f32 %v1608, %v1609
        %1611 = vadd.xlane.f32.xlu0 %v1610
        %v1612 = vpop.xlane.xlu0 %1611
        %v1613 = vmul.f32 %v1612, %v1604
        %v1614 = vadd.f32 %v1613, 1e-05
        %v1615 = vrsqrt.pop %v1614
        %v1616 = vmul.f32 %v1606, %v1615
        %v1617 = vmul.f32 %v1607, %v1615
        %v1618 = vmin.f32 %v1616, 20.0
        %v1619 = vmin.f32 %v1617, 20.0
        %v1620 = vmul.f32 %v1618, 1.442695
        %v1621 = vpow.pop %v1620
        %v1622 = vmul.f32 %v1619, 1.442695
        %v1623 = vpow.pop %v1622
        %v1624 = vadd.f32 %v1621, 2.0
        %v1625 = vadd.f32 %v1623, 2.0
        %v1626 = vmul.f32 %v1621, %v1624
        %v1627 = vmul.f32 %v1623, %v1625
        %v1628 = vadd.f32 %v1626, 2.0
        %v1629 = vadd.f32 %v1627, 2.0
        %v1630 = vrcp.pop %v1628
        %v1631 = vrcp.pop %v1629
        %v1632 = vmul.f32 %v1626, %v1630
        %v1633 = vmul.f32 %v1627, %v1631
        %vm1634 = vcmp.gt.f32.partialorder %v1616, 20.0
        %vm1635 = vcmp.gt.f32.partialorder %v1617, 20.0
        %v1636 = vsel %vm1634, 1.0, %v1632
        %v1637 = vsel %vm1635, 1.0, %v1633
        %v1638 = vmul.f32 %v1616, %v1636
        %v1639 = vmul.f32 %v1617, %v1637
        %1640 = vst [vmem:[%s325] sm:$0xff] %v1638
        %1641 = vst [vmem:[%s325 + $0x8] sm:$0xff] %v1639
        %s1642 = sand.u32 %s225, 1
        %s1643 = scalar_lea.sflag [#allocation4], %s1642
        %s1644 = sand.u32 %s225, 1
        %s1645 = smul.addr %s1644, 16
        %s1646 = scalar_lea.vmem [#allocation3], %s1645
        // Predicated region
        $region57: #{tpu_custom_call.1} parent=55 // pred_check
          %p1647 = pneg %p235
        $region58: #{tpu_custom_call.1} parent=55 // pred_check_branch
          %1649 = sbr.rel (%p1647) target = $region60
        $region59: #{tpu_custom_call.1} parent=55 // pred_region
          %s1651 = ssub.s32 256, 256
          %1652 = vsyncadd %s1643, %s1651
          %s1653 = smul.addr %s23, 2
          %s1654 = smul.addr %s1653, 128
          %s1655 = scalar_lea.hbm %s9, %s1654
          %s1657 = sshll.u32 %s1646, 4
          %s1658 = int_to_ptr.vmem [resolvable:$true] %s1657
          %1660 = dma.vmem_to_hbm [thread:$0]  %s1658, 256, %s1655, %s1643
        $region60: #{tpu_custom_call.1} parent=55 // pred_fallthru
          _
      $region56: #{tpu_custom_call.1} parent=5 // pred_fallthru
        _
      %p1661 = scmp.le.s32.totalorder 2, %s18
      // Predicated region
      $region61: #{tpu_custom_call.1} parent=5 // pred_check
        %p1662 = pneg %p1661
      $region62: #{tpu_custom_call.1} parent=5 // pred_check_branch
        %1664 = sbr.rel (%p1662) target = $region64
      $region63: #{tpu_custom_call.1} parent=5 // pred_region
        %s1665 = ssub.s32 %s18, 2
        // Predicated region
        $region65: #{tpu_custom_call.1} parent=63 // pred_check
          %p1666 = pneg %p241
        $region66: #{tpu_custom_call.1} parent=63 // pred_check_branch
          %1668 = sbr.rel (%p1666) target = $region68
        $region67: #{tpu_custom_call.1} parent=63 // pred_region
          %s1669 = sand.u32 %s226, 1
          %s1670 = scalar_lea.sflag [#allocation4], %s1669
          %s1671 = sand.u32 %s226, 1
          %s1672 = smul.addr %s1671, 16
          %s1673 = scalar_lea.vmem [#allocation3], %s1672
          %1674 = dma.done %s1670, 256
        $region68: #{tpu_custom_call.1} parent=63 // pred_fallthru
          _
      $region64: #{tpu_custom_call.1} parent=5 // pred_fallthru
        _
    $region6: #{tpu_custom_call.1} parent=1 // loop_footer
      %s22 = sadd.s32 1, %s18
    $region7: #{tpu_custom_call.1} parent=1 // loop_footer_branch
      %17 = sbr.rel target = $region3
    $region8: #{tpu_custom_call.1} parent=1 // loop_exit
      _
    %1675 = vsyncpa [#allocation4], 1
    %s1676 = scalar_lea.sflag [#allocation4], 1
    %1677 = vsyncpa %s1676, 1

</llo_original>
